<compile_context>
chip_gen: v7x
topology: tpu7x:2x2x1
jax: 0.10.0
libtpu: 0.0.40
codegen_flags: <defaults>
</compile_context>

<pallas_src>
import functools

import jax
import jax.numpy as jnp
import numpy as np
from jax.experimental import pallas as pl
from jax.experimental.pallas import tpu as pltpu

VMEM_LIMIT = 32 * 1024 * 1024  # safe on v5e/v6e/v7x; well above demo usage


def _round_up(x, m):
    return ((x + m - 1) // m) * m


def _row_tile(n, hdim, cap=1024):
    """Row-tile size.

    Single tile (== full array, no padding/masking needed) when it fits the
    ~1-2 MiB target; otherwise a multiple-of-128 row tile (keeps the [1, TN]
    id block lane-aligned and output stores unmasked), capped at `cap`.
    """
    target = max(128, min(cap, (((1 << 21) // (4 * hdim)) // 128) * 128))
    if n <= target:
        return int(max(n, 1))
    return int(target)


def _const_spec(shape):
    nd = len(shape)
    return pl.BlockSpec(shape, lambda *args, _nd=nd: (0,) * _nd)


def _pad_ids(ids, n_pad):
    ids = ids.astype(jnp.int32)
    n = ids.shape[0]
    ids_p = jnp.pad(ids, (0, n_pad - n), constant_values=-1)   # -1 -> no segment
    return ids_p.reshape(1, n_pad), ids_p.reshape(n_pad, 1)


# ----------------------------------------------------------------------------
# Kernel 1: node-branch segment-mean + counts + V_MLP_g gate.
#   Reduces over row tiles ("arbitrary" axis); sums & counts accumulate
#   directly in the constant-index, VMEM-resident outputs; last step applies
#   the 3-layer MLP + sigmoid to the [B_pad, H] means and inverts the counts.
# ----------------------------------------------------------------------------
def _node_gate_kernel(ids_row_ref, ids_col_ref, h_ref,
                      w1_ref, b1_ref, w2_ref, b2_ref, w3_ref, b3_ref,
                      gate_ref, invc_ref, *, b_pad):
    i = pl.program_id(0)

    @pl.when(i == 0)
    def _init():
        gate_ref[...] = jnp.zeros_like(gate_ref)
        invc_ref[...] = jnp.zeros_like(invc_ref)

    tn = h_ref.shape[0]
    ids_row = ids_row_ref[...]                                   # [1, TN]
    ids_col = ids_col_ref[...]                                   # [TN, 1]
    # Zero padded / boundary-block rows (0 * NaN guard for the matmul).
    h = jnp.where(ids_col >= 0, h_ref[...], 0.0)
    onehot = (jax.lax.broadcasted_iota(jnp.int32, (b_pad, tn), 0)
              == ids_row).astype(jnp.float32)                    # [B_pad, TN]
    gate_ref[...] += jnp.dot(onehot, h, preferred_element_type=jnp.float32)
    invc_ref[...] += jnp.sum(onehot, axis=1, keepdims=True)      # segment counts

    @pl.when(i == pl.num_programs(0) - 1)
    def _finalize():
        inv_c = 1.0 / jnp.maximum(invc_ref[...], 1.0)
        c = gate_ref[...] * inv_c                                # segment means
        z = jnp.maximum(jnp.dot(c, w1_ref[...],
                                preferred_element_type=jnp.float32) + b1_ref[...], 0.0)
        z = jnp.maximum(jnp.dot(z, w2_ref[...],
                                preferred_element_type=jnp.float32) + b2_ref[...], 0.0)
        z = jnp.dot(z, w3_ref[...], preferred_element_type=jnp.float32) + b3_ref[...]
        gate_ref[...] = jax.nn.sigmoid(z)
        invc_ref[...] = inv_c


def node_segmean_gate(h, ids, params, b_pad):
    """Returns (gate_V = sigmoid(V_MLP_g(scatter_mean(h, ids)))  [b_pad, H],
                inv_counts                                        [b_pad, 1])."""
    n, hdim = h.shape
    tn = _row_tile(n, hdim)
    grid = pl.cdiv(n, tn)
    ids_row, ids_col = _pad_ids(ids, grid * tn)
    w1, b1, w2, b2, w3, b3 = params
    kernel = functools.partial(_node_gate_kernel, b_pad=b_pad)
    return pl.pallas_call(
        kernel,
        out_shape=(jax.ShapeDtypeStruct((b_pad, hdim), jnp.float32),
                   jax.ShapeDtypeStruct((b_pad, 1), jnp.float32)),
        grid=(grid,),
        in_specs=[
            pl.BlockSpec((1, tn), lambda i: (0, i)),             # ids (lanes)
            pl.BlockSpec((tn, 1), lambda i: (i, 0)),             # ids (sublanes)
            pl.BlockSpec((tn, hdim), lambda i: (i, 0)),          # h row tile (unpadded)
            _const_spec((hdim, hdim)), _const_spec((1, hdim)),   # w1, b1 (resident)
            _const_spec((hdim, hdim)), _const_spec((1, hdim)),   # w2, b2
            _const_spec((hdim, hdim)), _const_spec((1, hdim)),   # w3, b3
        ],
        out_specs=(_const_spec((b_pad, hdim)), _const_spec((b_pad, 1))),
        compiler_params=pltpu.CompilerParams(
            dimension_semantics=("arbitrary",),
            vmem_limit_bytes=VMEM_LIMIT),
    )(ids_row, ids_col, h, w1, b1, w2, b2, w3, b3)


# ----------------------------------------------------------------------------
# Kernel 2 (fused): gated node write-back + edge-branch segment-mean + E_MLP_g.
#   Per row tile: gather gate_V rows (one-hot MXU matmul, gate stays VMEM
#   resident), write h_V_new, and accumulate the edge-branch segment sums of
#   the freshly gated features; last step applies E_MLP_g to the means.
# ----------------------------------------------------------------------------
def _gate_nodes_edge_gate_kernel(ids_row_ref, ids_col_ref, h_ref, gate_v_ref,
                                 invc_ref,
                                 w1_ref, b1_ref, w2_ref, b2_ref, w3_ref, b3_ref,
                                 out_ref, gate_e_ref, *, b_pad):
    i = pl.program_id(0)

    @pl.when(i == 0)
    def _init():
        gate_e_ref[...] = jnp.zeros_like(gate_e_ref)

    tn = h_ref.shape[0]
    ids_row = ids_row_ref[...]                                   # [1, TN]
    ids_col = ids_col_ref[...]                                   # [TN, 1]
    h = jnp.where(ids_col >= 0, h_ref[...], 0.0)

    # h_V_new = h_V * gate_V[batch_id]  (row gather via one-hot matmul)
    sel = (jax.lax.broadcasted_iota(jnp.int32, (tn, b_pad), 1)
           == ids_col).astype(jnp.float32)                       # [TN, B_pad]
    h_new = h * jnp.dot(sel, gate_v_ref[...],
                        preferred_element_type=jnp.float32)
    out_ref[...] = h_new.astype(out_ref.dtype)

    # Edge-branch segment sums of the gated node features.
    onehot = (jax.lax.broadcasted_iota(jnp.int32, (b_pad, tn), 0)
              == ids_row).astype(jnp.float32)                    # [B_pad, TN]
    gate_e_ref[...] += jnp.dot(onehot, h_new,
                               preferred_element_type=jnp.float32)

    @pl.when(i == pl.num_programs(0) - 1)
    def _finalize():
        c = gate_e_ref[...] * invc_ref[...]                      # segment means
        z = jnp.maximum(jnp.dot(c, w1_ref[...],
                                preferred_element_type=jnp.float32) + b1_ref[...], 0.0)
        z = jnp.maximum(jnp.dot(z, w2_ref[...],
                                preferred_element_type=jnp.float32) + b2_ref[...], 0.0)
        z = jnp.dot(z, w3_ref[...], preferred_element_type=jnp.float32) + b3_ref[...]
        gate_e_ref[...] = jax.nn.sigmoid(z)


def gate_nodes_and_edge_gate(h, ids, gate_v, inv_counts, params, b_pad):
    """Returns (h_new = h * gate_v[ids]  [N, H],
                gate_E = sigmoid(E_MLP_g(scatter_mean(h_new, ids)))  [b_pad, H])."""
    n, hdim = h.shape
    tn = _row_tile(n, hdim)
    grid = pl.cdiv(n, tn)
    ids_row, ids_col = _pad_ids(ids, grid * tn)
    w1, b1, w2, b2, w3, b3 = params
    kernel = functools.partial(_gate_nodes_edge_gate_kernel, b_pad=b_pad)
    # TODO(synk): input_output_aliases={2: 0} would update h_V in place; left
    # off because the original h_V is reused by the host-side reference check.
    return pl.pallas_call(
        kernel,
        out_shape=(jax.ShapeDtypeStruct((n, hdim), h.dtype),
                   jax.ShapeDtypeStruct((b_pad, hdim), jnp.float32)),
        grid=(grid,),
        in_specs=[
            pl.BlockSpec((1, tn), lambda i: (0, i)),             # ids (lanes)
            pl.BlockSpec((tn, 1), lambda i: (i, 0)),             # ids (sublanes)
            pl.BlockSpec((tn, hdim), lambda i: (i, 0)),          # h row tile
            _const_spec((b_pad, hdim)),                          # gate_V (resident)
            _const_spec((b_pad, 1)),                             # 1/counts (resident)
            _const_spec((hdim, hdim)), _const_spec((1, hdim)),   # E_MLP_g weights
            _const_spec((hdim, hdim)), _const_spec((1, hdim)),
            _const_spec((hdim, hdim)), _const_spec((1, hdim)),
        ],
        out_specs=(pl.BlockSpec((tn, hdim), lambda i: (i, 0)),
                   _const_spec((b_pad, hdim))),
        compiler_params=pltpu.CompilerParams(
            dimension_semantics=("arbitrary",),
            vmem_limit_bytes=VMEM_LIMIT),
    )(ids_row, ids_col, h, gate_v, inv_counts, w1, b1, w2, b2, w3, b3)


# ----------------------------------------------------------------------------
# Kernel 3: streaming gather + gate for edges:  out = h_E * gate[ids].
# ----------------------------------------------------------------------------
def _gather_gate_kernel(ids_col_ref, h_ref, gate_ref, out_ref, *, b_pad):
    tr = h_ref.shape[0]
    sel = (jax.lax.broadcasted_iota(jnp.int32, (tr, b_pad), 1)
           == ids_col_ref[...]).astype(jnp.float32)              # [TR, B_pad]
    g = jnp.dot(sel, gate_ref[...], preferred_element_type=jnp.float32)
    out_ref[...] = (h_ref[...] * g).astype(out_ref.dtype)


def gather_gate(h, ids, gate):
    r, hdim = h.shape
    b_pad = gate.shape[0]
    tr = _row_tile(r, hdim)
    grid = pl.cdiv(r, tr)
    _, ids_col = _pad_ids(ids, grid * tr)
    kernel = functools.partial(_gather_gate_kernel, b_pad=b_pad)
    return pl.pallas_call(
        kernel,
        out_shape=jax.ShapeDtypeStruct((r, hdim), h.dtype),
        grid=(grid,),
        in_specs=[
            pl.BlockSpec((tr, 1), lambda i: (i, 0)),             # ids (sublanes)
            pl.BlockSpec((tr, hdim), lambda i: (i, 0)),          # h row tile
            _const_spec((b_pad, hdim)),                          # gate (resident)
        ],
        out_specs=pl.BlockSpec((tr, hdim), lambda i: (i, 0)),
        compiler_params=pltpu.CompilerParams(
            dimension_semantics=("parallel",),                   # megacore sharding
            vmem_limit_bytes=VMEM_LIMIT),
    )(ids_col, h, gate)


# ----------------------------------------------------------------------------
# Context module forward (node_context=True, edge_context=True)
# ----------------------------------------------------------------------------
def init_mlp_params(key, hdim, scale=0.1):
    ks = jax.random.split(key, 3)
    params = []
    for k in ks:
        kw, kb = jax.random.split(k)
        params += [jax.random.normal(kw, (hdim, hdim), jnp.float32) * scale,
                   jax.random.normal(kb, (1, hdim), jnp.float32) * scale]
    return tuple(params)


@functools.partial(jax.jit, static_argnames=("num_graphs",))
def context_forward(h_V, h_E, edge_idx, batch_id, v_mlp_g_params, e_mlp_g_params,
                    *, num_graphs):
    b_pad = _round_up(num_graphs, 8)

    # Node branch: segment mean + counts + V_MLP_g gate, all in one kernel.
    gate_V, inv_counts = node_segmean_gate(h_V, batch_id, v_mlp_g_params, b_pad)

    # Fused: gated h_V write-back + edge-branch segment mean + E_MLP_g gate.
    h_V, gate_E = gate_nodes_and_edge_gate(h_V, batch_id, gate_V, inv_counts,
                                           e_mlp_g_params, b_pad)

    # Edge branch gather/gate (tiny int gather for edge->graph ids kept in JAX).
    edge_batch = batch_id[edge_idx[0]]
    h_E = gather_gate(h_E, edge_batch, gate_E)
    return h_V, h_E


# ----------------------------------------------------------------------------
# Pure-JAX reference for verification
# ----------------------------------------------------------------------------
def _mlp_g_ref(x, params):
    w1, b1, w2, b2, w3, b3 = params
    z = jax.nn.relu(x @ w1 + b1)
    z = jax.nn.relu(z @ w2 + b2)
    return jax.nn.sigmoid(z @ w3 + b3)


def _scatter_mean_ref(h, ids, num_segments):
    sums = jax.ops.segment_sum(h, ids, num_segments=num_segments)
    cnts = jax.ops.segment_sum(jnp.ones((h.shape[0],), jnp.float32), ids,
                               num_segments=num_segments)
    return sums / jnp.maximum(cnts, 1.0)[:, None]


def context_forward_ref(h_V, h_E, edge_idx, batch_id, num_graphs, vp, ep):
    c_V = _scatter_mean_ref(h_V, batch_id, num_graphs)
    h_V = h_V * _mlp_g_ref(c_V[batch_id], vp)
    c_V = _scatter_mean_ref(h_V, batch_id, num_graphs)
    h_E = h_E * _mlp_g_ref(c_V[batch_id[edge_idx[0]]], ep)
    return h_V, h_E


if __name__ == "__main__":
    H = 128         # num_hidden (multiple of 128 -> lane-dense stores)
    N = 48          # number of nodes
    E = 96          # number of edges
    B = 4           # number of graphs in the batch

    key = jax.random.PRNGKey(0)
    k_hv, k_he, k_bid, k_eidx, k_vp, k_ep = jax.random.split(key, 6)

    h_V = jax.random.normal(k_hv, (N, H), jnp.float32)
    h_E = jax.random.normal(k_he, (E, H), jnp.float32)
    batch_id = jnp.sort(jax.random.randint(k_bid, (N,), 0, B)).astype(jnp.int32)
    edge_idx = jax.random.randint(k_eidx, (2, E), 0, N).astype(jnp.int32)

    v_mlp_g_params = init_mlp_params(k_vp, H)
    e_mlp_g_params = init_mlp_params(k_ep, H)

    out_hV, out_hE = context_forward(h_V, h_E, edge_idx, batch_id,
                                     v_mlp_g_params, e_mlp_g_params,
                                     num_graphs=B)
    jax.block_until_ready((out_hV, out_hE))

    ref_hV, ref_hE = context_forward_ref(h_V, h_E, edge_idx, batch_id, B,
                                         v_mlp_g_params, e_mlp_g_params)
    np.testing.assert_allclose(np.asarray(out_hV), np.asarray(ref_hV),
                               rtol=2e-2, atol=2e-2)
    np.testing.assert_allclose(np.asarray(out_hE), np.asarray(ref_hE),
                               rtol=2e-2, atol=2e-2)

    print("KERNEL_OK")
</pallas_src>

<mosaic_0001>
module attributes {stable_mosaic.version = 11 : i64} {
  func.func @_gather_gate_kernel(%arg0: i32, %arg1: memref<96x1xi32, #tpu.memory_space<vmem>>, %arg2: memref<96x128xf32, #tpu.memory_space<vmem>>, %arg3: memref<8x128xf32, #tpu.memory_space<vmem>>, %arg4: memref<96x128xf32, #tpu.memory_space<vmem>>) attributes {dimension_semantics = [#tpu.dimension_semantics<parallel>], iteration_bounds = array<i64: 1>, scalar_prefetch = 0 : i64, scratch_operands = 0 : i64, tpu.core_type = #tpu.core_type<tc>, window_params = [{transform_indices = @transform_0, window_bounds = array<i64: 96, 1>}, {transform_indices = @transform_1, window_bounds = array<i64: 96, 128>}, {pipeline_mode = #tpu.pipeline_mode<synchronous>, transform_indices = @transform_2, window_bounds = array<i64: 8, 128>}, {transform_indices = @transform_3, window_bounds = array<i64: 96, 128>}]} {
    %0 = tpu.iota {dimensions = array<i32: 1>} : vector<96x8xi32>
    %c0 = arith.constant 0 : index
    %c0_0 = arith.constant 0 : index
    %1 = vector.load %arg1[%c0, %c0_0] : memref<96x1xi32, #tpu.memory_space<vmem>>, vector<96x1xi32>
    %2 = vector.broadcast %1 : vector<96x1xi32> to vector<96x8xi32>
    %3 = arith.cmpi eq, %0, %2 : vector<96x8xi32>
    %4 = arith.extui %3 : vector<96x8xi1> to vector<96x8xi32>
    %5 = arith.sitofp %4 : vector<96x8xi32> to vector<96x8xf32>
    %c0_1 = arith.constant 0 : index
    %c0_2 = arith.constant 0 : index
    %6 = vector.load %arg3[%c0_1, %c0_2] : memref<8x128xf32, #tpu.memory_space<vmem>>, vector<8x128xf32>
    %cst = arith.constant dense<0.000000e+00> : vector<96x128xf32>
    %7 = tpu.matmul %5, %6, %cst {dimension_numbers = #tpu.dot_dimension_numbers<[1], [0], [0], [1], [0, 0, 1, 1], [], []>} : vector<96x8xf32>, vector<8x128xf32>, vector<96x128xf32> -> vector<96x128xf32>
    %c0_3 = arith.constant 0 : index
    %c0_4 = arith.constant 0 : index
    %8 = vector.load %arg2[%c0_3, %c0_4] : memref<96x128xf32, #tpu.memory_space<vmem>>, vector<96x128xf32>
    %9 = arith.mulf %8, %7 : vector<96x128xf32>
    %c0_5 = arith.constant 0 : index
    %c0_6 = arith.constant 0 : index
    %10 = vector.load %arg4[%c0_5, %c0_6] : memref<96x128xf32, #tpu.memory_space<vmem>>, vector<96x128xf32>
    tpu.vector_store %arg4[%c0_5, %c0_6], %9 {strides = array<i32>} : memref<96x128xf32, #tpu.memory_space<vmem>>, vector<96x128xf32>,
    return
  }
  func.func @transform_0(%arg0: i32) -> (i32, i32) {
    %c0_i32 = arith.constant 0 : i32
    %c0_i32_0 = arith.constant 0 : i32
    return %arg0, %c0_i32 : i32, i32
  }
  func.func @transform_1(%arg0: i32) -> (i32, i32) {
    %c0_i32 = arith.constant 0 : i32
    %c0_i32_0 = arith.constant 0 : i32
    return %arg0, %c0_i32 : i32, i32
  }
  func.func @transform_2(%arg0: i32) -> (i32, i32) {
    %c0_i32 = arith.constant 0 : i32
    %c0_i32_0 = arith.constant 0 : i32
    %c0_i32_1 = arith.constant 0 : i32
    return %c0_i32, %c0_i32_0 : i32, i32
  }
  func.func @transform_3(%arg0: i32) -> (i32, i32) {
    %c0_i32 = arith.constant 0 : i32
    %c0_i32_0 = arith.constant 0 : i32
    return %arg0, %c0_i32 : i32, i32
  }
}

module attributes {stable_mosaic.version = 11 : i64} {
  func.func @_gate_nodes_edge_gate_kernel(%arg0: i32, %arg1: memref<1x48xi32, #tpu.memory_space<vmem>>, %arg2: memref<48x1xi32, #tpu.memory_space<vmem>>, %arg3: memref<48x128xf32, #tpu.memory_space<vmem>>, %arg4: memref<8x128xf32, #tpu.memory_space<vmem>>, %arg5: memref<8x1xf32, #tpu.memory_space<vmem>>, %arg6: memref<128x128xf32, #tpu.memory_space<vmem>>, %arg7: memref<1x128xf32, #tpu.memory_space<vmem>>, %arg8: memref<128x128xf32, #tpu.memory_space<vmem>>, %arg9: memref<1x128xf32, #tpu.memory_space<vmem>>, %arg10: memref<128x128xf32, #tpu.memory_space<vmem>>, %arg11: memref<1x128xf32, #tpu.memory_space<vmem>>, %arg12: memref<48x128xf32, #tpu.memory_space<vmem>>, %arg13: memref<8x128xf32, #tpu.memory_space<vmem>>) attributes {dimension_semantics = [#tpu.dimension_semantics<arbitrary>], iteration_bounds = array<i64: 1>, scalar_prefetch = 0 : i64, scratch_operands = 0 : i64, tpu.core_type = #tpu.core_type<tc>, window_params = [{transform_indices = @transform_0, window_bounds = array<i64: 1, 48>}, {transform_indices = @transform_1, window_bounds = array<i64: 48, 1>}, {transform_indices = @transform_2, window_bounds = array<i64: 48, 128>}, {pipeline_mode = #tpu.pipeline_mode<synchronous>, transform_indices = @transform_3, window_bounds = array<i64: 8, 128>}, {pipeline_mode = #tpu.pipeline_mode<synchronous>, transform_indices = @transform_4, window_bounds = array<i64: 8, 1>}, {pipeline_mode = #tpu.pipeline_mode<synchronous>, transform_indices = @transform_5, window_bounds = array<i64: 128, 128>}, {pipeline_mode = #tpu.pipeline_mode<synchronous>, transform_indices = @transform_6, window_bounds = array<i64: 1, 128>}, {pipeline_mode = #tpu.pipeline_mode<synchronous>, transform_indices = @transform_7, window_bounds = array<i64: 128, 128>}, {pipeline_mode = #tpu.pipeline_mode<synchronous>, transform_indices = @transform_8, window_bounds = array<i64: 1, 128>}, {pipeline_mode = #tpu.pipeline_mode<synchronous>, transform_indices = @transform_9, window_bounds = array<i64: 128, 128>}, {pipeline_mode = #tpu.pipeline_mode<synchronous>, transform_indices = @transform_10, window_bounds = array<i64: 1, 128>}, {transform_indices = @transform_11, window_bounds = array<i64: 48, 128>}, {pipeline_mode = #tpu.pipeline_mode<synchronous>, transform_indices = @transform_12, window_bounds = array<i64: 8, 128>}]} {
    %c0_i32 = arith.constant 0 : i32
    %0 = arith.cmpi eq, %arg0, %c0_i32 : i32
    %1 = arith.extui %0 : i1 to i32
    %c0_i32_0 = arith.constant 0 : i32
    %2 = arith.cmpi ne, %1, %c0_i32_0 : i32
    scf.if %2 {
      %cst_19 = arith.constant 0.000000e+00 : f32
      %33 = vector.broadcast %cst_19 : f32 to vector<8x128xf32>
      %c0_20 = arith.constant 0 : index
      %c0_21 = arith.constant 0 : index
      %34 = vector.load %arg13[%c0_20, %c0_21] : memref<8x128xf32, #tpu.memory_space<vmem>>, vector<8x128xf32>
      tpu.vector_store %arg13[%c0_20, %c0_21], %33 {strides = array<i32>} : memref<8x128xf32, #tpu.memory_space<vmem>>, vector<8x128xf32>,
    } else {
    }
    %c0 = arith.constant 0 : index
    %c0_1 = arith.constant 0 : index
    %3 = vector.load %arg1[%c0, %c0_1] : memref<1x48xi32, #tpu.memory_space<vmem>>, vector<1x48xi32>
    %c0_2 = arith.constant 0 : index
    %c0_3 = arith.constant 0 : index
    %4 = vector.load %arg2[%c0_2, %c0_3] : memref<48x1xi32, #tpu.memory_space<vmem>>, vector<48x1xi32>
    %c0_i32_4 = arith.constant 0 : i32
    %5 = vector.broadcast %c0_i32_4 : i32 to vector<48x1xi32>
    %6 = arith.cmpi sge, %4, %5 : vector<48x1xi32>
    %c0_5 = arith.constant 0 : index
    %c0_6 = arith.constant 0 : index
    %7 = vector.load %arg3[%c0_5, %c0_6] : memref<48x128xf32, #tpu.memory_space<vmem>>, vector<48x128xf32>
    %cst = arith.constant 0.000000e+00 : f32
    %8 = vector.shape_cast %6 : vector<48x1xi1> to vector<48x1xi1>
    %9 = vector.broadcast %8 : vector<48x1xi1> to vector<48x128xi1>
    %10 = vector.broadcast %cst : f32 to vector<48x128xf32>
    %11 = arith.select %9, %7, %10 : vector<48x128xi1>, vector<48x128xf32>
    %12 = tpu.iota {dimensions = array<i32: 1>} : vector<48x8xi32>
    %13 = vector.broadcast %4 : vector<48x1xi32> to vector<48x8xi32>
    %14 = arith.cmpi eq, %12, %13 : vector<48x8xi32>
    %15 = arith.extui %14 : vector<48x8xi1> to vector<48x8xi32>
    %16 = arith.sitofp %15 : vector<48x8xi32> to vector<48x8xf32>
    %c0_7 = arith.constant 0 : index
    %c0_8 = arith.constant 0 : index
    %17 = vector.load %arg4[%c0_7, %c0_8] : memref<8x128xf32, #tpu.memory_space<vmem>>, vector<8x128xf32>
    %cst_9 = arith.constant dense<0.000000e+00> : vector<48x128xf32>
    %18 = tpu.matmul %16, %17, %cst_9 {dimension_numbers = #tpu.dot_dimension_numbers<[1], [0], [0], [1], [0, 0, 1, 1], [], []>} : vector<48x8xf32>, vector<8x128xf32>, vector<48x128xf32> -> vector<48x128xf32>
    %19 = arith.mulf %11, %18 : vector<48x128xf32>
    %c0_10 = arith.constant 0 : index
    %c0_11 = arith.constant 0 : index
    %20 = vector.load %arg12[%c0_10, %c0_11] : memref<48x128xf32, #tpu.memory_space<vmem>>, vector<48x128xf32>
    tpu.vector_store %arg12[%c0_10, %c0_11], %19 {strides = array<i32>} : memref<48x128xf32, #tpu.memory_space<vmem>>, vector<48x128xf32>,
    %21 = tpu.iota {dimensions = array<i32: 0>} : vector<8x48xi32>
    %22 = vector.broadcast %3 : vector<1x48xi32> to vector<8x48xi32>
    %23 = arith.cmpi eq, %21, %22 : vector<8x48xi32>
    %24 = arith.extui %23 : vector<8x48xi1> to vector<8x48xi32>
    %25 = arith.sitofp %24 : vector<8x48xi32> to vector<8x48xf32>
    %c0_12 = arith.constant 0 : index
    %c0_13 = arith.constant 0 : index
    %26 = vector.load %arg13[%c0_12, %c0_13] : memref<8x128xf32, #tpu.memory_space<vmem>>, vector<8x128xf32>
    %cst_14 = arith.constant dense<0.000000e+00> : vector<8x128xf32>
    %27 = tpu.matmul %25, %19, %cst_14 {dimension_numbers = #tpu.dot_dimension_numbers<[1], [0], [0], [1], [0, 0, 1, 1], [], []>} : vector<8x48xf32>, vector<48x128xf32>, vector<8x128xf32> -> vector<8x128xf32>
    %28 = arith.addf %26, %27 : vector<8x128xf32>
    %c0_15 = arith.constant 0 : index
    %c0_16 = arith.constant 0 : index
    %29 = vector.load %arg13[%c0_15, %c0_16] : memref<8x128xf32, #tpu.memory_space<vmem>>, vector<8x128xf32>
    tpu.vector_store %arg13[%c0_15, %c0_16], %28 {strides = array<i32>} : memref<8x128xf32, #tpu.memory_space<vmem>>, vector<8x128xf32>,
    %c0_i32_17 = arith.constant 0 : i32
    %30 = arith.cmpi eq, %arg0, %c0_i32_17 : i32
    %31 = arith.extui %30 : i1 to i32
    %c0_i32_18 = arith.constant 0 : i32
    %32 = arith.cmpi ne, %31, %c0_i32_18 : i32
    scf.if %32 {
      %c0_19 = arith.constant 0 : index
      %c0_20 = arith.constant 0 : index
      %33 = vector.load %arg13[%c0_19, %c0_20] : memref<8x128xf32, #tpu.memory_space<vmem>>, vector<8x128xf32>
      %c0_21 = arith.constant 0 : index
      %c0_22 = arith.constant 0 : index
      %34 = vector.load %arg5[%c0_21, %c0_22] : memref<8x1xf32, #tpu.memory_space<vmem>>, vector<8x1xf32>
      %35 = vector.broadcast %34 : vector<8x1xf32> to vector<8x128xf32>
      %36 = arith.mulf %33, %35 : vector<8x128xf32>
      %c0_23 = arith.constant 0 : index
      %c0_24 = arith.constant 0 : index
      %37 = vector.load %arg6[%c0_23, %c0_24] : memref<128x128xf32, #tpu.memory_space<vmem>>, vector<128x128xf32>
      %cst_25 = arith.constant dense<0.000000e+00> : vector<8x128xf32>
      %38 = tpu.matmul %36, %37, %cst_25 {dimension_numbers = #tpu.dot_dimension_numbers<[1], [0], [0], [1], [0, 0, 1, 1], [], []>} : vector<8x128xf32>, vector<128x128xf32>, vector<8x128xf32> -> vector<8x128xf32>
      %c0_26 = arith.constant 0 : index
      %c0_27 = arith.constant 0 : index
      %39 = vector.load %arg7[%c0_26, %c0_27] : memref<1x128xf32, #tpu.memory_space<vmem>>, vector<1x128xf32>
      %40 = vector.broadcast %39 : vector<1x128xf32> to vector<8x128xf32>
      %41 = arith.addf %38, %40 : vector<8x128xf32>
      %cst_28 = arith.constant 0.000000e+00 : f32
      %42 = vector.broadcast %cst_28 : f32 to vector<8x128xf32>
      %43 = arith.maximumf %41, %42 : vector<8x128xf32>
      %c0_29 = arith.constant 0 : index
      %c0_30 = arith.constant 0 : index
      %44 = vector.load %arg8[%c0_29, %c0_30] : memref<128x128xf32, #tpu.memory_space<vmem>>, vector<128x128xf32>
      %cst_31 = arith.constant dense<0.000000e+00> : vector<8x128xf32>
      %45 = tpu.matmul %43, %44, %cst_31 {dimension_numbers = #tpu.dot_dimension_numbers<[1], [0], [0], [1], [0, 0, 1, 1], [], []>} : vector<8x128xf32>, vector<128x128xf32>, vector<8x128xf32> -> vector<8x128xf32>
      %c0_32 = arith.constant 0 : index
      %c0_33 = arith.constant 0 : index
      %46 = vector.load %arg9[%c0_32, %c0_33] : memref<1x128xf32, #tpu.memory_space<vmem>>, vector<1x128xf32>
      %47 = vector.broadcast %46 : vector<1x128xf32> to vector<8x128xf32>
      %48 = arith.addf %45, %47 : vector<8x128xf32>
      %cst_34 = arith.constant 0.000000e+00 : f32
      %49 = vector.broadcast %cst_34 : f32 to vector<8x128xf32>
      %50 = arith.maximumf %48, %49 : vector<8x128xf32>
      %c0_35 = arith.constant 0 : index
      %c0_36 = arith.constant 0 : index
      %51 = vector.load %arg10[%c0_35, %c0_36] : memref<128x128xf32, #tpu.memory_space<vmem>>, vector<128x128xf32>
      %cst_37 = arith.constant dense<0.000000e+00> : vector<8x128xf32>
      %52 = tpu.matmul %50, %51, %cst_37 {dimension_numbers = #tpu.dot_dimension_numbers<[1], [0], [0], [1], [0, 0, 1, 1], [], []>} : vector<8x128xf32>, vector<128x128xf32>, vector<8x128xf32> -> vector<8x128xf32>
      %c0_38 = arith.constant 0 : index
      %c0_39 = arith.constant 0 : index
      %53 = vector.load %arg11[%c0_38, %c0_39] : memref<1x128xf32, #tpu.memory_space<vmem>>, vector<1x128xf32>
      %54 = vector.broadcast %53 : vector<1x128xf32> to vector<8x128xf32>
      %55 = arith.addf %52, %54 : vector<8x128xf32>
      %56 = arith.negf %55 : vector<8x128xf32>
      %57 = math.exp %56 : vector<8x128xf32>
      %cst_40 = arith.constant 1.000000e+00 : f32
      %58 = vector.broadcast %cst_40 : f32 to vector<8x128xf32>
      %59 = arith.addf %58, %57 : vector<8x128xf32>
      %60 = arith.divf %58, %59 : vector<8x128xf32>
      %c0_41 = arith.constant 0 : index
      %c0_42 = arith.constant 0 : index
      %61 = vector.load %arg13[%c0_41, %c0_42] : memref<8x128xf32, #tpu.memory_space<vmem>>, vector<8x128xf32>
      tpu.vector_store %arg13[%c0_41, %c0_42], %60 {strides = array<i32>} : memref<8x128xf32, #tpu.memory_space<vmem>>, vector<8x128xf32>,
    } else {
    }
    return
  }
  func.func @transform_0(%arg0: i32) -> (i32, i32) {
    %c0_i32 = arith.constant 0 : i32
    %c0_i32_0 = arith.constant 0 : i32
    return %c0_i32, %arg0 : i32, i32
  }
  func.func @transform_1(%arg0: i32) -> (i32, i32) {
    %c0_i32 = arith.constant 0 : i32
    %c0_i32_0 = arith.constant 0 : i32
    return %arg0, %c0_i32 : i32, i32
  }
  func.func @transform_2(%arg0: i32) -> (i32, i32) {
    %c0_i32 = arith.constant 0 : i32
    %c0_i32_0 = arith.constant 0 : i32
    return %arg0, %c0_i32 : i32, i32
  }
  func.func @transform_3(%arg0: i32) -> (i32, i32) {
    %c0_i32 = arith.constant 0 : i32
    %c0_i32_0 = arith.constant 0 : i32
    %c0_i32_1 = arith.constant 0 : i32
    return %c0_i32, %c0_i32_0 : i32, i32
  }
  func.func @transform_4(%arg0: i32) -> (i32, i32) {
    %c0_i32 = arith.constant 0 : i32
    %c0_i32_0 = arith.constant 0 : i32
    %c0_i32_1 = arith.constant 0 : i32
    return %c0_i32, %c0_i32_0 : i32, i32
  }
  func.func @transform_5(%arg0: i32) -> (i32, i32) {
    %c0_i32 = arith.constant 0 : i32
    %c0_i32_0 = arith.constant 0 : i32
    %c0_i32_1 = arith.constant 0 : i32
    return %c0_i32, %c0_i32_0 : i32, i32
  }
  func.func @transform_6(%arg0: i32) -> (i32, i32) {
    %c0_i32 = arith.constant 0 : i32
    %c0_i32_0 = arith.constant 0 : i32
    %c0_i32_1 = arith.constant 0 : i32
    return %c0_i32, %c0_i32_0 : i32, i32
  }
  func.func @transform_7(%arg0: i32) -> (i32, i32) {
    %c0_i32 = arith.constant 0 : i32
    %c0_i32_0 = arith.constant 0 : i32
    %c0_i32_1 = arith.constant 0 : i32
    return %c0_i32, %c0_i32_0 : i32, i32
  }
  func.func @transform_8(%arg0: i32) -> (i32, i32) {
    %c0_i32 = arith.constant 0 : i32
    %c0_i32_0 = arith.constant 0 : i32
    %c0_i32_1 = arith.constant 0 : i32
    return %c0_i32, %c0_i32_0 : i32, i32
  }
  func.func @transform_9(%arg0: i32) -> (i32, i32) {
    %c0_i32 = arith.constant 0 : i32
    %c0_i32_0 = arith.constant 0 : i32
    %c0_i32_1 = arith.constant 0 : i32
    return %c0_i32, %c0_i32_0 : i32, i32
  }
  func.func @transform_10(%arg0: i32) -> (i32, i32) {
    %c0_i32 = arith.constant 0 : i32
    %c0_i32_0 = arith.constant 0 : i32
    %c0_i32_1 = arith.constant 0 : i32
    return %c0_i32, %c0_i32_0 : i32, i32
  }
  func.func @transform_11(%arg0: i32) -> (i32, i32) {
    %c0_i32 = arith.constant 0 : i32
    %c0_i32_0 = arith.constant 0 : i32
    return %arg0, %c0_i32 : i32, i32
  }
  func.func @transform_12(%arg0: i32) -> (i32, i32) {
    %c0_i32 = arith.constant 0 : i32
    %c0_i32_0 = arith.constant 0 : i32
    %c0_i32_1 = arith.constant 0 : i32
    return %c0_i32, %c0_i32_0 : i32, i32
  }
}

module attributes {stable_mosaic.version = 11 : i64} {
  func.func @_node_gate_kernel(%arg0: i32, %arg1: memref<1x48xi32, #tpu.memory_space<vmem>>, %arg2: memref<48x1xi32, #tpu.memory_space<vmem>>, %arg3: memref<48x128xf32, #tpu.memory_space<vmem>>, %arg4: memref<128x128xf32, #tpu.memory_space<vmem>>, %arg5: memref<1x128xf32, #tpu.memory_space<vmem>>, %arg6: memref<128x128xf32, #tpu.memory_space<vmem>>, %arg7: memref<1x128xf32, #tpu.memory_space<vmem>>, %arg8: memref<128x128xf32, #tpu.memory_space<vmem>>, %arg9: memref<1x128xf32, #tpu.memory_space<vmem>>, %arg10: memref<8x128xf32, #tpu.memory_space<vmem>>, %arg11: memref<8x1xf32, #tpu.memory_space<vmem>>) attributes {dimension_semantics = [#tpu.dimension_semantics<arbitrary>], iteration_bounds = array<i64: 1>, scalar_prefetch = 0 : i64, scratch_operands = 0 : i64, tpu.core_type = #tpu.core_type<tc>, window_params = [{transform_indices = @transform_0, window_bounds = array<i64: 1, 48>}, {transform_indices = @transform_1, window_bounds = array<i64: 48, 1>}, {transform_indices = @transform_2, window_bounds = array<i64: 48, 128>}, {pipeline_mode = #tpu.pipeline_mode<synchronous>, transform_indices = @transform_3, window_bounds = array<i64: 128, 128>}, {pipeline_mode = #tpu.pipeline_mode<synchronous>, transform_indices = @transform_4, window_bounds = array<i64: 1, 128>}, {pipeline_mode = #tpu.pipeline_mode<synchronous>, transform_indices = @transform_5, window_bounds = array<i64: 128, 128>}, {pipeline_mode = #tpu.pipeline_mode<synchronous>, transform_indices = @transform_6, window_bounds = array<i64: 1, 128>}, {pipeline_mode = #tpu.pipeline_mode<synchronous>, transform_indices = @transform_7, window_bounds = array<i64: 128, 128>}, {pipeline_mode = #tpu.pipeline_mode<synchronous>, transform_indices = @transform_8, window_bounds = array<i64: 1, 128>}, {pipeline_mode = #tpu.pipeline_mode<synchronous>, transform_indices = @transform_9, window_bounds = array<i64: 8, 128>}, {pipeline_mode = #tpu.pipeline_mode<synchronous>, transform_indices = @transform_10, window_bounds = array<i64: 8, 1>}]} {
    %c0_i32 = arith.constant 0 : i32
    %0 = arith.cmpi eq, %arg0, %c0_i32 : i32
    %1 = arith.extui %0 : i1 to i32
    %c0_i32_0 = arith.constant 0 : i32
    %2 = arith.cmpi ne, %1, %c0_i32_0 : i32
    scf.if %2 {
      %cst_19 = arith.constant 0.000000e+00 : f32
      %29 = vector.broadcast %cst_19 : f32 to vector<8x128xf32>
      %c0_20 = arith.constant 0 : index
      %c0_21 = arith.constant 0 : index
      %30 = vector.load %arg10[%c0_20, %c0_21] : memref<8x128xf32, #tpu.memory_space<vmem>>, vector<8x128xf32>
      tpu.vector_store %arg10[%c0_20, %c0_21], %29 {strides = array<i32>} : memref<8x128xf32, #tpu.memory_space<vmem>>, vector<8x128xf32>,
      %cst_22 = arith.constant 0.000000e+00 : f32
      %31 = vector.broadcast %cst_22 : f32 to vector<8x1xf32>
      %c0_23 = arith.constant 0 : index
      %c0_24 = arith.constant 0 : index
      %32 = vector.load %arg11[%c0_23, %c0_24] : memref<8x1xf32, #tpu.memory_space<vmem>>, vector<8x1xf32>
      tpu.vector_store %arg11[%c0_23, %c0_24], %31 {strides = array<i32>} : memref<8x1xf32, #tpu.memory_space<vmem>>, vector<8x1xf32>,
    } else {
    }
    %c0 = arith.constant 0 : index
    %c0_1 = arith.constant 0 : index
    %3 = vector.load %arg1[%c0, %c0_1] : memref<1x48xi32, #tpu.memory_space<vmem>>, vector<1x48xi32>
    %c0_2 = arith.constant 0 : index
    %c0_3 = arith.constant 0 : index
    %4 = vector.load %arg2[%c0_2, %c0_3] : memref<48x1xi32, #tpu.memory_space<vmem>>, vector<48x1xi32>
    %c0_i32_4 = arith.constant 0 : i32
    %5 = vector.broadcast %c0_i32_4 : i32 to vector<48x1xi32>
    %6 = arith.cmpi sge, %4, %5 : vector<48x1xi32>
    %c0_5 = arith.constant 0 : index
    %c0_6 = arith.constant 0 : index
    %7 = vector.load %arg3[%c0_5, %c0_6] : memref<48x128xf32, #tpu.memory_space<vmem>>, vector<48x128xf32>
    %cst = arith.constant 0.000000e+00 : f32
    %8 = vector.shape_cast %6 : vector<48x1xi1> to vector<48x1xi1>
    %9 = vector.broadcast %8 : vector<48x1xi1> to vector<48x128xi1>
    %10 = vector.broadcast %cst : f32 to vector<48x128xf32>
    %11 = arith.select %9, %7, %10 : vector<48x128xi1>, vector<48x128xf32>
    %12 = tpu.iota {dimensions = array<i32: 0>} : vector<8x48xi32>
    %13 = vector.broadcast %3 : vector<1x48xi32> to vector<8x48xi32>
    %14 = arith.cmpi eq, %12, %13 : vector<8x48xi32>
    %15 = arith.extui %14 : vector<8x48xi1> to vector<8x48xi32>
    %16 = arith.sitofp %15 : vector<8x48xi32> to vector<8x48xf32>
    %c0_7 = arith.constant 0 : index
    %c0_8 = arith.constant 0 : index
    %17 = vector.load %arg10[%c0_7, %c0_8] : memref<8x128xf32, #tpu.memory_space<vmem>>, vector<8x128xf32>
    %cst_9 = arith.constant dense<0.000000e+00> : vector<8x128xf32>
    %18 = tpu.matmul %16, %11, %cst_9 {dimension_numbers = #tpu.dot_dimension_numbers<[1], [0], [0], [1], [0, 0, 1, 1], [], []>} : vector<8x48xf32>, vector<48x128xf32>, vector<8x128xf32> -> vector<8x128xf32>
    %19 = arith.addf %17, %18 : vector<8x128xf32>
    %c0_10 = arith.constant 0 : index
    %c0_11 = arith.constant 0 : index
    %20 = vector.load %arg10[%c0_10, %c0_11] : memref<8x128xf32, #tpu.memory_space<vmem>>, vector<8x128xf32>
    tpu.vector_store %arg10[%c0_10, %c0_11], %19 {strides = array<i32>} : memref<8x128xf32, #tpu.memory_space<vmem>>, vector<8x128xf32>,
    %c0_12 = arith.constant 0 : index
    %c0_13 = arith.constant 0 : index
    %21 = vector.load %arg11[%c0_12, %c0_13] : memref<8x1xf32, #tpu.memory_space<vmem>>, vector<8x1xf32>
    %cst_14 = arith.constant dense<0.000000e+00> : vector<8xf32>
    %22 = vector.multi_reduction <add>, %16, %cst_14 [1] : vector<8x48xf32> to vector<8xf32>
    %23 = vector.shape_cast %22 : vector<8xf32> to vector<8x1xf32>
    %24 = arith.addf %21, %23 : vector<8x1xf32>
    %c0_15 = arith.constant 0 : index
    %c0_16 = arith.constant 0 : index
    %25 = vector.load %arg11[%c0_15, %c0_16] : memref<8x1xf32, #tpu.memory_space<vmem>>, vector<8x1xf32>
    tpu.vector_store %arg11[%c0_15, %c0_16], %24 {strides = array<i32>} : memref<8x1xf32, #tpu.memory_space<vmem>>, vector<8x1xf32>,
    %c0_i32_17 = arith.constant 0 : i32
    %26 = arith.cmpi eq, %arg0, %c0_i32_17 : i32
    %27 = arith.extui %26 : i1 to i32
    %c0_i32_18 = arith.constant 0 : i32
    %28 = arith.cmpi ne, %27, %c0_i32_18 : i32
    scf.if %28 {
      %c0_19 = arith.constant 0 : index
      %c0_20 = arith.constant 0 : index
      %29 = vector.load %arg11[%c0_19, %c0_20] : memref<8x1xf32, #tpu.memory_space<vmem>>, vector<8x1xf32>
      %cst_21 = arith.constant 1.000000e+00 : f32
      %30 = vector.broadcast %cst_21 : f32 to vector<8x1xf32>
      %31 = arith.maximumf %29, %30 : vector<8x1xf32>
      %cst_22 = arith.constant 1.000000e+00 : f32
      %32 = vector.broadcast %cst_22 : f32 to vector<8x1xf32>
      %33 = arith.divf %32, %31 : vector<8x1xf32>
      %c0_23 = arith.constant 0 : index
      %c0_24 = arith.constant 0 : index
      %34 = vector.load %arg10[%c0_23, %c0_24] : memref<8x128xf32, #tpu.memory_space<vmem>>, vector<8x128xf32>
      %35 = vector.broadcast %33 : vector<8x1xf32> to vector<8x128xf32>
      %36 = arith.mulf %34, %35 : vector<8x128xf32>
      %c0_25 = arith.constant 0 : index
      %c0_26 = arith.constant 0 : index
      %37 = vector.load %arg4[%c0_25, %c0_26] : memref<128x128xf32, #tpu.memory_space<vmem>>, vector<128x128xf32>
      %cst_27 = arith.constant dense<0.000000e+00> : vector<8x128xf32>
      %38 = tpu.matmul %36, %37, %cst_27 {dimension_numbers = #tpu.dot_dimension_numbers<[1], [0], [0], [1], [0, 0, 1, 1], [], []>} : vector<8x128xf32>, vector<128x128xf32>, vector<8x128xf32> -> vector<8x128xf32>
      %c0_28 = arith.constant 0 : index
      %c0_29 = arith.constant 0 : index
      %39 = vector.load %arg5[%c0_28, %c0_29] : memref<1x128xf32, #tpu.memory_space<vmem>>, vector<1x128xf32>
      %40 = vector.broadcast %39 : vector<1x128xf32> to vector<8x128xf32>
      %41 = arith.addf %38, %40 : vector<8x128xf32>
      %cst_30 = arith.constant 0.000000e+00 : f32
      %42 = vector.broadcast %cst_30 : f32 to vector<8x128xf32>
      %43 = arith.maximumf %41, %42 : vector<8x128xf32>
      %c0_31 = arith.constant 0 : index
      %c0_32 = arith.constant 0 : index
      %44 = vector.load %arg6[%c0_31, %c0_32] : memref<128x128xf32, #tpu.memory_space<vmem>>, vector<128x128xf32>
      %cst_33 = arith.constant dense<0.000000e+00> : vector<8x128xf32>
      %45 = tpu.matmul %43, %44, %cst_33 {dimension_numbers = #tpu.dot_dimension_numbers<[1], [0], [0], [1], [0, 0, 1, 1], [], []>} : vector<8x128xf32>, vector<128x128xf32>, vector<8x128xf32> -> vector<8x128xf32>
      %c0_34 = arith.constant 0 : index
      %c0_35 = arith.constant 0 : index
      %46 = vector.load %arg7[%c0_34, %c0_35] : memref<1x128xf32, #tpu.memory_space<vmem>>, vector<1x128xf32>
      %47 = vector.broadcast %46 : vector<1x128xf32> to vector<8x128xf32>
      %48 = arith.addf %45, %47 : vector<8x128xf32>
      %cst_36 = arith.constant 0.000000e+00 : f32
      %49 = vector.broadcast %cst_36 : f32 to vector<8x128xf32>
      %50 = arith.maximumf %48, %49 : vector<8x128xf32>
      %c0_37 = arith.constant 0 : index
      %c0_38 = arith.constant 0 : index
      %51 = vector.load %arg8[%c0_37, %c0_38] : memref<128x128xf32, #tpu.memory_space<vmem>>, vector<128x128xf32>
      %cst_39 = arith.constant dense<0.000000e+00> : vector<8x128xf32>
      %52 = tpu.matmul %50, %51, %cst_39 {dimension_numbers = #tpu.dot_dimension_numbers<[1], [0], [0], [1], [0, 0, 1, 1], [], []>} : vector<8x128xf32>, vector<128x128xf32>, vector<8x128xf32> -> vector<8x128xf32>
      %c0_40 = arith.constant 0 : index
      %c0_41 = arith.constant 0 : index
      %53 = vector.load %arg9[%c0_40, %c0_41] : memref<1x128xf32, #tpu.memory_space<vmem>>, vector<1x128xf32>
      %54 = vector.broadcast %53 : vector<1x128xf32> to vector<8x128xf32>
      %55 = arith.addf %52, %54 : vector<8x128xf32>
      %56 = arith.negf %55 : vector<8x128xf32>
      %57 = math.exp %56 : vector<8x128xf32>
      %cst_42 = arith.constant 1.000000e+00 : f32
      %58 = vector.broadcast %cst_42 : f32 to vector<8x128xf32>
      %59 = arith.addf %58, %57 : vector<8x128xf32>
      %60 = arith.divf %58, %59 : vector<8x128xf32>
      %c0_43 = arith.constant 0 : index
      %c0_44 = arith.constant 0 : index
      %61 = vector.load %arg10[%c0_43, %c0_44] : memref<8x128xf32, #tpu.memory_space<vmem>>, vector<8x128xf32>
      tpu.vector_store %arg10[%c0_43, %c0_44], %60 {strides = array<i32>} : memref<8x128xf32, #tpu.memory_space<vmem>>, vector<8x128xf32>,
      %c0_45 = arith.constant 0 : index
      %c0_46 = arith.constant 0 : index
      %62 = vector.load %arg11[%c0_45, %c0_46] : memref<8x1xf32, #tpu.memory_space<vmem>>, vector<8x1xf32>
      tpu.vector_store %arg11[%c0_45, %c0_46], %33 {strides = array<i32>} : memref<8x1xf32, #tpu.memory_space<vmem>>, vector<8x1xf32>,
    } else {
    }
    return
  }
  func.func @transform_0(%arg0: i32) -> (i32, i32) {
    %c0_i32 = arith.constant 0 : i32
    %c0_i32_0 = arith.constant 0 : i32
    return %c0_i32, %arg0 : i32, i32
  }
  func.func @transform_1(%arg0: i32) -> (i32, i32) {
    %c0_i32 = arith.constant 0 : i32
    %c0_i32_0 = arith.constant 0 : i32
    return %arg0, %c0_i32 : i32, i32
  }
  func.func @transform_2(%arg0: i32) -> (i32, i32) {
    %c0_i32 = arith.constant 0 : i32
    %c0_i32_0 = arith.constant 0 : i32
    return %arg0, %c0_i32 : i32, i32
  }
  func.func @transform_3(%arg0: i32) -> (i32, i32) {
    %c0_i32 = arith.constant 0 : i32
    %c0_i32_0 = arith.constant 0 : i32
    %c0_i32_1 = arith.constant 0 : i32
    return %c0_i32, %c0_i32_0 : i32, i32
  }
  func.func @transform_4(%arg0: i32) -> (i32, i32) {
    %c0_i32 = arith.constant 0 : i32
    %c0_i32_0 = arith.constant 0 : i32
    %c0_i32_1 = arith.constant 0 : i32
    return %c0_i32, %c0_i32_0 : i32, i32
  }
  func.func @transform_5(%arg0: i32) -> (i32, i32) {
    %c0_i32 = arith.constant 0 : i32
    %c0_i32_0 = arith.constant 0 : i32
    %c0_i32_1 = arith.constant 0 : i32
    return %c0_i32, %c0_i32_0 : i32, i32
  }
  func.func @transform_6(%arg0: i32) -> (i32, i32) {
    %c0_i32 = arith.constant 0 : i32
    %c0_i32_0 = arith.constant 0 : i32
    %c0_i32_1 = arith.constant 0 : i32
    return %c0_i32, %c0_i32_0 : i32, i32
  }
  func.func @transform_7(%arg0: i32) -> (i32, i32) {
    %c0_i32 = arith.constant 0 : i32
    %c0_i32_0 = arith.constant 0 : i32
    %c0_i32_1 = arith.constant 0 : i32
    return %c0_i32, %c0_i32_0 : i32, i32
  }
  func.func @transform_8(%arg0: i32) -> (i32, i32) {
    %c0_i32 = arith.constant 0 : i32
    %c0_i32_0 = arith.constant 0 : i32
    %c0_i32_1 = arith.constant 0 : i32
    return %c0_i32, %c0_i32_0 : i32, i32
  }
  func.func @transform_9(%arg0: i32) -> (i32, i32) {
    %c0_i32 = arith.constant 0 : i32
    %c0_i32_0 = arith.constant 0 : i32
    %c0_i32_1 = arith.constant 0 : i32
    return %c0_i32, %c0_i32_0 : i32, i32
  }
  func.func @transform_10(%arg0: i32) -> (i32, i32) {
    %c0_i32 = arith.constant 0 : i32
    %c0_i32_0 = arith.constant 0 : i32
    %c0_i32_1 = arith.constant 0 : i32
    return %c0_i32, %c0_i32_0 : i32, i32
  }
}

</mosaic_0001>

<llo_original>
// kernel: context_forward.5
$region0: #{context_forward.5}
  #allocation0 [shape = 'u32[]', space=smem, size = 0x4, offset = 0x4, fixed_abs, tag = 'smem constant byte address 0x4 - core index']
  #allocation1 [shape = 'u32[144,128]{1,0:T(1,128)}', space=vmem, size = 0x12000, scoped, tag = 'internal scratch']
  %s0 = inlined_call_operand.vmem [shape: s32[96,1], index: 0, kind: input, shape index: {}]
  %s1 = inlined_call_operand.vmem [shape: f32[96,128], index: 1, kind: input, shape index: {}]
  %s2 = inlined_call_operand.vmem [shape: f32[8,128], index: 2, kind: input, shape index: {}]
  %s3 = inlined_call_operand.hbm [shape: f32[96,128], index: 3, kind: output, shape index: {}]
  %s4 = sld [smem:[#allocation0]]
  $region22: #{context_forward.5} parent=0
    _
  %s6 = ssub.s32 1, %s4
  %s7 = scalar_select 0, %s6, %s4
  $region1: #{context_forward.5} parent=0
    #allocation2 [shape = 'u8[49152]{0}', space=vmem, size = 0xc000, scoped, tag = 'output window, operand 0, single buffered']
    #allocation3 [shape = 's32[1]{0}', space=sflag, size = 0x4, scoped, tag = 'scoped memory for context_forward.5']
    %8 = vsyncpa [#allocation3], 0
    // Predicated region
    $region2: #{context_forward.5} parent=1 // pred_check
      _
    $region3: #{context_forward.5} parent=1 // pred_check_branch
      %10 = sbr.rel (0) target = $region5
    $region4: #{context_forward.5} parent=1 // pred_region
      _
    $region5: #{context_forward.5} parent=1 // pred_fallthru
      _
    // Predicated region
    $region6: #{context_forward.5} parent=1 // pred_check
      _
    $region7: #{context_forward.5} parent=1 // pred_check_branch
      %12 = sbr.rel (0) target = $region9
    $region8: #{context_forward.5} parent=1 // pred_region
      _
    $region9: #{context_forward.5} parent=1 // pred_fallthru
      _
    // Predicated region
    $region10: #{context_forward.5} parent=1 // pred_check
      _
    $region11: #{context_forward.5} parent=1 // pred_check_branch
      %14 = sbr.rel (0) target = $region13
    $region12: #{context_forward.5} parent=1 // pred_region
      _
    $region13: #{context_forward.5} parent=1 // pred_fallthru
      _
    %v15 = vlaneseq
    %v16 = vand.u32 %v15, 127
    %v17 = vld [vmem:[%s0] sm:$0xff]
    %v18 = vld [vmem:[%s0 + $0x8] sm:$0xff]
    %v19 = vld [vmem:[%s0 + $0x10] sm:$0xff]
    %v20 = vld [vmem:[%s0 + $0x18] sm:$0xff]
    %v21 = vld [vmem:[%s0 + $0x20] sm:$0xff]
    %v22 = vld [vmem:[%s0 + $0x28] sm:$0xff]
    %v23 = vld [vmem:[%s0 + $0x30] sm:$0xff]
    %v24 = vld [vmem:[%s0 + $0x38] sm:$0xff]
    %v25 = vld [vmem:[%s0 + $0x40] sm:$0xff]
    %v26 = vld [vmem:[%s0 + $0x48] sm:$0xff]
    %v27 = vld [vmem:[%s0 + $0x50] sm:$0xff]
    %v28 = vld [vmem:[%s0 + $0x58] sm:$0xff]
    %29 = vset.pattern.permute.xlu0 0
    %30 = vperm.xlu0 %29, %v17
    %v31 = vpop.permute.xlu0 %30
    %32 = vset.pattern.permute.xlu0 0
    %33 = vperm.xlu0 %32, %v18
    %v34 = vpop.permute.xlu0 %33
    %35 = vset.pattern.permute.xlu0 0
    %36 = vperm.xlu0 %35, %v19
    %v37 = vpop.permute.xlu0 %36
    %38 = vset.pattern.permute.xlu0 0
    %39 = vperm.xlu0 %38, %v20
    %v40 = vpop.permute.xlu0 %39
    %41 = vset.pattern.permute.xlu0 0
    %42 = vperm.xlu0 %41, %v21
    %v43 = vpop.permute.xlu0 %42
    %44 = vset.pattern.permute.xlu0 0
    %45 = vperm.xlu0 %44, %v22
    %v46 = vpop.permute.xlu0 %45
    %47 = vset.pattern.permute.xlu0 0
    %48 = vperm.xlu0 %47, %v23
    %v49 = vpop.permute.xlu0 %48
    %50 = vset.pattern.permute.xlu0 0
    %51 = vperm.xlu0 %50, %v24
    %v52 = vpop.permute.xlu0 %51
    %53 = vset.pattern.permute.xlu0 0
    %54 = vperm.xlu0 %53, %v25
    %v55 = vpop.permute.xlu0 %54
    %56 = vset.pattern.permute.xlu0 0
    %57 = vperm.xlu0 %56, %v26
    %v58 = vpop.permute.xlu0 %57
    %59 = vset.pattern.permute.xlu0 0
    %60 = vperm.xlu0 %59, %v27
    %v61 = vpop.permute.xlu0 %60
    %62 = vset.pattern.permute.xlu0 0
    %63 = vperm.xlu0 %62, %v28
    %v64 = vpop.permute.xlu0 %63
    %vm65 = vcmp.eq.s32.totalorder %v16, %v31
    %vm66 = vcmp.eq.s32.totalorder %v16, %v34
    %vm67 = vcmp.eq.s32.totalorder %v16, %v37
    %vm68 = vcmp.eq.s32.totalorder %v16, %v40
    %vm69 = vcmp.eq.s32.totalorder %v16, %v43
    %vm70 = vcmp.eq.s32.totalorder %v16, %v46
    %vm71 = vcmp.eq.s32.totalorder %v16, %v49
    %vm72 = vcmp.eq.s32.totalorder %v16, %v52
    %vm73 = vcmp.eq.s32.totalorder %v16, %v55
    %vm74 = vcmp.eq.s32.totalorder %v16, %v58
    %vm75 = vcmp.eq.s32.totalorder %v16, %v61
    %vm76 = vcmp.eq.s32.totalorder %v16, %v64
    %v77 = vsel %vm65, 1, 0
    %v78 = vsel %vm66, 1, 0
    %v79 = vsel %vm67, 1, 0
    %v80 = vsel %vm68, 1, 0
    %v81 = vsel %vm69, 1, 0
    %v82 = vsel %vm70, 1, 0
    %v83 = vsel %vm71, 1, 0
    %v84 = vsel %vm72, 1, 0
    %v85 = vsel %vm73, 1, 0
    %v86 = vsel %vm74, 1, 0
    %v87 = vsel %vm75, 1, 0
    %v88 = vsel %vm76, 1, 0
    %v89 = vcvt.s32.f32 %v77
    %v90 = vcvt.s32.f32 %v78
    %v91 = vcvt.s32.f32 %v79
    %v92 = vcvt.s32.f32 %v80
    %v93 = vcvt.s32.f32 %v81
    %v94 = vcvt.s32.f32 %v82
    %v95 = vcvt.s32.f32 %v83
    %v96 = vcvt.s32.f32 %v84
    %v97 = vcvt.s32.f32 %v85
    %v98 = vcvt.s32.f32 %v86
    %v99 = vcvt.s32.f32 %v87
    %v100 = vcvt.s32.f32 %v88
    %v101 = vld [vmem:[%s2] sm:$0xff]
    %vm102 = vcmask 64512
    %v104 = vsel %vm102, %v89, 0
    %v107 = vsel %vm102, %v90, 0
    %v110 = vsel %vm102, %v91, 0
    %v113 = vsel %vm102, %v92, 0
    %v116 = vsel %vm102, %v93, 0
    %v119 = vsel %vm102, %v94, 0
    %v122 = vsel %vm102, %v95, 0
    %v125 = vsel %vm102, %v96, 0
    %v128 = vsel %vm102, %v97, 0
    %v131 = vsel %vm102, %v98, 0
    %v134 = vsel %vm102, %v99, 0
    %v137 = vsel %vm102, %v100, 0
    %139 = vmatprep.subr.mxu0 0.0
    %140 = vmatpush1.msra.mxu0 %v101
    %141 = vmatprep.subr.mxu0 0.0
    %142 = vmatpush1.msra.mxu0 0.0
    %143 = vmatprep.subr.mxu0 0.0
    %144 = vmatpush1.msra.mxu0 0.0
    %145 = vmatprep.subr.mxu0 0.0
    %146 = vmatpush1.msra.mxu0 0.0
    %147 = vmatprep.subr.mxu0 0.0
    %148 = vmatpush1.msra.mxu0 0.0
    %149 = vmatprep.subr.mxu0 0.0
    %150 = vmatpush1.msra.mxu0 0.0
    %151 = vmatprep.subr.mxu0 0.0
    %152 = vmatpush1.msra.mxu0 0.0
    %153 = vmatprep.subr.mxu0 0.0
    %154 = vmatpush1.msra.mxu0 0.0
    %155 = vmatprep.subr.mxu0 0.0
    %156 = vmatpush1.msra.mxu0 0.0
    %157 = vmatprep.subr.mxu0 0.0
    %158 = vmatpush1.msra.mxu0 0.0
    %159 = vmatprep.subr.mxu0 0.0
    %160 = vmatpush1.msra.mxu0 0.0
    %161 = vmatprep.subr.mxu0 0.0
    %162 = vmatpush1.msra.mxu0 0.0
    %163 = vmatprep.subr.mxu0 0.0
    %164 = vmatpush1.msra.mxu0 0.0
    %165 = vmatprep.subr.mxu0 0.0
    %166 = vmatpush1.msra.mxu0 0.0
    %167 = vmatprep.subr.mxu0 0.0
    %168 = vmatpush1.msra.mxu0 0.0
    %169 = vmatprep.subr.mxu0 0.0
    %170 = vmatpush1.msra.mxu0 0.0
    %171 = vmatprep.subr.mxu0 0.0
    %172 = vmatpush1.msra.mxu0 0.0
    %173 = vmatprep.subr.mxu0 0.0
    %174 = vmatpush1.msra.mxu0 0.0
    %175 = vmatprep.subr.mxu0 0.0
    %176 = vmatpush1.msra.mxu0 0.0
    %177 = vmatprep.subr.mxu0 0.0
    %178 = vmatpush1.msra.mxu0 0.0
    %179 = vmatprep.subr.mxu0 0.0
    %180 = vmatpush1.msra.mxu0 0.0
    %181 = vmatprep.subr.mxu0 0.0
    %182 = vmatpush1.msra.mxu0 0.0
    %183 = vmatprep.subr.mxu0 0.0
    %184 = vmatpush1.msra.mxu0 0.0
    %185 = vmatprep.subr.mxu0 0.0
    %186 = vmatpush1.msra.mxu0 0.0
    %187 = vmatprep.subr.mxu0 0.0
    %188 = vmatpush1.msra.mxu0 0.0
    %189 = vmatprep.subr.mxu0 0.0
    %190 = vmatpush1.msra.mxu0 0.0
    %191 = vmatprep.subr.mxu0 0.0
    %192 = vmatpush1.msra.mxu0 0.0
    %193 = vmatprep.subr.mxu0 0.0
    %194 = vmatpush1.msra.mxu0 0.0
    %195 = vmatprep.subr.mxu0 0.0
    %196 = vmatpush1.msra.mxu0 0.0
    %197 = vmatprep.subr.mxu0 0.0
    %198 = vmatpush1.msra.mxu0 0.0
    %199 = vmatprep.subr.mxu0 0.0
    %200 = vmatpush1.msra.mxu0 0.0
    %201 = vmatprep.subr.mxu0 0.0
    %202 = vmatpush1.msra.mxu0 0.0
    %203 = vmatprep.mubr.f32.mxu0 0.0
    %204 = vmatmul.mubr.f32.gmra.mrb[0].mxu0 %v104
    %v205 = vpop.f32.mrb[0].mxu0
    %v206 = vadd.f32 0.0, %v205
    %v207 = vpop.f32.mrb[0].mxu0
    %208 = vmatprep.mubr.f32.mxu0 0.0
    %209 = vmatmul.mubr.f32.gmra.mrb[0].mxu0 %v107
    %v210 = vpop.f32.mrb[0].mxu0
    %v211 = vadd.f32 0.0, %v210
    %v212 = vpop.f32.mrb[0].mxu0
    %213 = vmatprep.mubr.f32.mxu0 0.0
    %214 = vmatmul.mubr.f32.gmra.mrb[0].mxu0 %v110
    %v215 = vpop.f32.mrb[0].mxu0
    %v216 = vadd.f32 0.0, %v215
    %v217 = vpop.f32.mrb[0].mxu0
    %218 = vmatprep.mubr.f32.mxu0 0.0
    %219 = vmatmul.mubr.f32.gmra.mrb[0].mxu0 %v113
    %v220 = vpop.f32.mrb[0].mxu0
    %v221 = vadd.f32 0.0, %v220
    %v222 = vpop.f32.mrb[0].mxu0
    %223 = vmatprep.mubr.f32.mxu0 0.0
    %224 = vmatmul.mubr.f32.gmra.mrb[0].mxu0 %v116
    %v225 = vpop.f32.mrb[0].mxu0
    %v226 = vadd.f32 0.0, %v225
    %v227 = vpop.f32.mrb[0].mxu0
    %228 = vmatprep.mubr.f32.mxu0 0.0
    %229 = vmatmul.mubr.f32.gmra.mrb[0].mxu0 %v119
    %v230 = vpop.f32.mrb[0].mxu0
    %v231 = vadd.f32 0.0, %v230
    %v232 = vpop.f32.mrb[0].mxu0
    %233 = vmatprep.mubr.f32.mxu0 0.0
    %234 = vmatmul.mubr.f32.gmra.mrb[0].mxu0 %v122
    %v235 = vpop.f32.mrb[0].mxu0
    %v236 = vadd.f32 0.0, %v235
    %v237 = vpop.f32.mrb[0].mxu0
    %238 = vmatprep.mubr.f32.mxu0 0.0
    %239 = vmatmul.mubr.f32.gmra.mrb[0].mxu0 %v125
    %v240 = vpop.f32.mrb[0].mxu0
    %v241 = vadd.f32 0.0, %v240
    %v242 = vpop.f32.mrb[0].mxu0
    %243 = vmatprep.mubr.f32.mxu0 0.0
    %244 = vmatmul.mubr.f32.gmra.mrb[0].mxu0 %v128
    %v245 = vpop.f32.mrb[0].mxu0
    %v246 = vadd.f32 0.0, %v245
    %v247 = vpop.f32.mrb[0].mxu0
    %248 = vmatprep.mubr.f32.mxu0 0.0
    %249 = vmatmul.mubr.f32.gmra.mrb[0].mxu0 %v131
    %v250 = vpop.f32.mrb[0].mxu0
    %v251 = vadd.f32 0.0, %v250
    %v252 = vpop.f32.mrb[0].mxu0
    %253 = vmatprep.mubr.f32.mxu0 0.0
    %254 = vmatmul.mubr.f32.gmra.mrb[0].mxu0 %v134
    %v255 = vpop.f32.mrb[0].mxu0
    %v256 = vadd.f32 0.0, %v255
    %v257 = vpop.f32.mrb[0].mxu0
    %258 = vmatprep.mubr.f32.mxu0 0.0
    %259 = vmatmul.mubr.f32.gmra.mrb[0].mxu0 %v137
    %v260 = vpop.f32.mrb[0].mxu0
    %v261 = vadd.f32 0.0, %v260
    %v262 = vpop.f32.mrb[0].mxu0
    %263 = vdwg.mxu0
    %v264 = vld [vmem:[%s1] sm:$0xff]
    %v265 = vld [vmem:[%s1 + $0x8] sm:$0xff]
    %v266 = vld [vmem:[%s1 + $0x10] sm:$0xff]
    %v267 = vld [vmem:[%s1 + $0x18] sm:$0xff]
    %v268 = vld [vmem:[%s1 + $0x20] sm:$0xff]
    %v269 = vld [vmem:[%s1 + $0x28] sm:$0xff]
    %v270 = vld [vmem:[%s1 + $0x30] sm:$0xff]
    %v271 = vld [vmem:[%s1 + $0x38] sm:$0xff]
    %v272 = vld [vmem:[%s1 + $0x40] sm:$0xff]
    %v273 = vld [vmem:[%s1 + $0x48] sm:$0xff]
    %v274 = vld [vmem:[%s1 + $0x50] sm:$0xff]
    %v275 = vld [vmem:[%s1 + $0x58] sm:$0xff]
    %v276 = vmul.f32 %v264, %v206
    %v277 = vmul.f32 %v265, %v211
    %v278 = vmul.f32 %v266, %v216
    %v279 = vmul.f32 %v267, %v221
    %v280 = vmul.f32 %v268, %v226
    %v281 = vmul.f32 %v269, %v231
    %v282 = vmul.f32 %v270, %v236
    %v283 = vmul.f32 %v271, %v241
    %v284 = vmul.f32 %v272, %v246
    %v285 = vmul.f32 %v273, %v251
    %v286 = vmul.f32 %v274, %v256
    %v287 = vmul.f32 %v275, %v261
    %288 = vst [vmem:[#allocation2] sm:$0xff] %v276
    %289 = vst [vmem:[#allocation2 + $0x8] sm:$0xff] %v277
    %290 = vst [vmem:[#allocation2 + $0x10] sm:$0xff] %v278
    %291 = vst [vmem:[#allocation2 + $0x18] sm:$0xff] %v279
    %292 = vst [vmem:[#allocation2 + $0x20] sm:$0xff] %v280
    %293 = vst [vmem:[#allocation2 + $0x28] sm:$0xff] %v281
    %294 = vst [vmem:[#allocation2 + $0x30] sm:$0xff] %v282
    %295 = vst [vmem:[#allocation2 + $0x38] sm:$0xff] %v283
    %296 = vst [vmem:[#allocation2 + $0x40] sm:$0xff] %v284
    %297 = vst [vmem:[#allocation2 + $0x48] sm:$0xff] %v285
    %298 = vst [vmem:[#allocation2 + $0x50] sm:$0xff] %v286
    %299 = vst [vmem:[#allocation2 + $0x58] sm:$0xff] %v287
    // Predicated region
    $region14: #{context_forward.5} parent=1 // pred_check
      _
    $region15: #{context_forward.5} parent=1 // pred_check_branch
      %301 = sbr.rel (0) target = $region17
    $region16: #{context_forward.5} parent=1 // pred_region
      %s303 = ssub.s32 1536, 1536
      %304 = vsyncadd [#allocation3], %s303
      %s305 = sshll.u32 [#allocation2], 4
      %s306 = int_to_ptr.vmem [resolvable:$true] %s305
      %311 = dma.vmem_to_hbm [thread:$0]  %s306, 1536, %s3, [#allocation3], 128, 128, 8
    $region17: #{context_forward.5} parent=1 // pred_fallthru
      _
    // Predicated region
    $region18: #{context_forward.5} parent=1 // pred_check
      _
    $region19: #{context_forward.5} parent=1 // pred_check_branch
      %313 = sbr.rel (0) target = $region21
    $region20: #{context_forward.5} parent=1 // pred_region
      %314 = dma.done [#allocation3], 1536
    $region21: #{context_forward.5} parent=1 // pred_fallthru
      _
    %315 = vsyncpa [#allocation3], 1

// kernel: context_forward.3
$region0: #{context_forward.3}
  #allocation0 [shape = 'u32[]', space=smem, size = 0x4, offset = 0x4, fixed_abs, tag = 'smem constant byte address 0x4 - core index']
  #allocation1 [shape = 'u32[144,128]{1,0:T(1,128)}', space=vmem, size = 0x12000, scoped, tag = 'internal scratch']
  %s0 = inlined_call_operand.vmem [shape: s32[1,48], index: 0, kind: input, shape index: {}]
  %s1 = inlined_call_operand.vmem [shape: s32[48,1], index: 1, kind: input, shape index: {}]
  %s2 = inlined_call_operand.vmem [shape: f32[48,128], index: 2, kind: input, shape index: {}]
  %s3 = inlined_call_operand.vmem [shape: f32[128,128], index: 3, kind: input, shape index: {}]
  %s4 = inlined_call_operand.vmem [shape: f32[1,128], index: 4, kind: input, shape index: {}]
  %s5 = inlined_call_operand.vmem [shape: f32[128,128], index: 5, kind: input, shape index: {}]
  %s6 = inlined_call_operand.vmem [shape: f32[1,128], index: 6, kind: input, shape index: {}]
  %s7 = inlined_call_operand.vmem [shape: f32[128,128], index: 7, kind: input, shape index: {}]
  %s8 = inlined_call_operand.vmem [shape: f32[1,128], index: 8, kind: input, shape index: {}]
  %s9 = inlined_call_operand.vmem [shape: f32[8,128], index: 9, kind: output, shape index: {0}]
  %s10 = inlined_call_operand.vmem [shape: f32[8,1], index: 10, kind: output, shape index: {1}]
  %11 = xla_tuple %s9, %s10
  %s12 = sld [smem:[#allocation0]]
  $region62: #{context_forward.3} parent=0
    _
  %s14 = ssub.s32 1, %s12
  %s15 = scalar_select 0, %s14, %s12
  // Predicated region
  $region2: #{context_forward.3} parent=0 // pred_check
    _
  $region3: #{context_forward.3} parent=0 // pred_check_branch
    %17 = sbr.rel (0) target = $region5
  $region4: #{context_forward.3} parent=0 // pred_region
    _
  $region5: #{context_forward.3} parent=0 // pred_fallthru
    _
  // Predicated region
  $region6: #{context_forward.3} parent=0 // pred_check
    _
  $region7: #{context_forward.3} parent=0 // pred_check_branch
    %19 = sbr.rel (0) target = $region9
  $region8: #{context_forward.3} parent=0 // pred_region
    _
  $region9: #{context_forward.3} parent=0 // pred_fallthru
    _
  // Predicated region
  $region10: #{context_forward.3} parent=0 // pred_check
    _
  $region11: #{context_forward.3} parent=0 // pred_check_branch
    %21 = sbr.rel (0) target = $region13
  $region12: #{context_forward.3} parent=0 // pred_region
    _
  $region13: #{context_forward.3} parent=0 // pred_fallthru
    _
  // Predicated region
  $region14: #{context_forward.3} parent=0 // pred_check
    _
  $region15: #{context_forward.3} parent=0 // pred_check_branch
    %23 = sbr.rel (0) target = $region17
  $region16: #{context_forward.3} parent=0 // pred_region
    _
  $region17: #{context_forward.3} parent=0 // pred_fallthru
    _
  // Predicated region
  $region18: #{context_forward.3} parent=0 // pred_check
    _
  $region19: #{context_forward.3} parent=0 // pred_check_branch
    %25 = sbr.rel (0) target = $region21
  $region20: #{context_forward.3} parent=0 // pred_region
    _
  $region21: #{context_forward.3} parent=0 // pred_fallthru
    _
  // Predicated region
  $region22: #{context_forward.3} parent=0 // pred_check
    _
  $region23: #{context_forward.3} parent=0 // pred_check_branch
    %27 = sbr.rel (0) target = $region25
  $region24: #{context_forward.3} parent=0 // pred_region
    _
  $region25: #{context_forward.3} parent=0 // pred_fallthru
    _
  // Predicated region
  $region26: #{context_forward.3} parent=0 // pred_check
    _
  $region27: #{context_forward.3} parent=0 // pred_check_branch
    %29 = sbr.rel (0) target = $region29
  $region28: #{context_forward.3} parent=0 // pred_region
    _
  $region29: #{context_forward.3} parent=0 // pred_fallthru
    _
  // Predicated region
  $region30: #{context_forward.3} parent=0 // pred_check
    _
  $region31: #{context_forward.3} parent=0 // pred_check_branch
    %31 = sbr.rel (0) target = $region33
  $region32: #{context_forward.3} parent=0 // pred_region
    _
  $region33: #{context_forward.3} parent=0 // pred_fallthru
    _
  // Predicated region
  $region34: #{context_forward.3} parent=0 // pred_check
    _
  $region35: #{context_forward.3} parent=0 // pred_check_branch
    %33 = sbr.rel (0) target = $region37
  $region36: #{context_forward.3} parent=0 // pred_region
    _
  $region37: #{context_forward.3} parent=0 // pred_fallthru
    _
  %p34 = scmp.eq.s32.totalorder 0, 0
  // Predicated region
  $region38: #{context_forward.3} parent=0 // pred_check
    %p35 = pneg %p34
  $region39: #{context_forward.3} parent=0 // pred_check_branch
    %37 = sbr.rel (%p35) target = $region41
  $region40: #{context_forward.3} parent=0 // pred_region
    %38 = vst [vmem:[%s9] sm:$0xff] 0.0
    %vm39 = vcmask 7168
    %40 = vst.msk [vmem:[%s10] sm:$0xff] %vm39, 0.0
  $region41: #{context_forward.3} parent=0 // pred_fallthru
    _
  %v41 = vld [vmem:[%s0] sm:$0x1]
  %v42 = vld [vmem:[%s1] sm:$0xff]
  %v43 = vld [vmem:[%s1 + $0x8] sm:$0xff]
  %v44 = vld [vmem:[%s1 + $0x10] sm:$0xff]
  %v45 = vld [vmem:[%s1 + $0x18] sm:$0xff]
  %v46 = vld [vmem:[%s1 + $0x20] sm:$0xff]
  %v47 = vld [vmem:[%s1 + $0x28] sm:$0xff]
  %vm48 = vcmp.ge.s32.totalorder %v42, 0
  %vm49 = vcmp.ge.s32.totalorder %v43, 0
  %vm50 = vcmp.ge.s32.totalorder %v44, 0
  %vm51 = vcmp.ge.s32.totalorder %v45, 0
  %vm52 = vcmp.ge.s32.totalorder %v46, 0
  %vm53 = vcmp.ge.s32.totalorder %v47, 0
  %v54 = vld [vmem:[%s2] sm:$0xff]
  %v55 = vld [vmem:[%s2 + $0x8] sm:$0xff]
  %v56 = vld [vmem:[%s2 + $0x10] sm:$0xff]
  %v57 = vld [vmem:[%s2 + $0x18] sm:$0xff]
  %v58 = vld [vmem:[%s2 + $0x20] sm:$0xff]
  %v59 = vld [vmem:[%s2 + $0x28] sm:$0xff]
  %v60 = vsel %vm48, 1, 0
  %v61 = vsel %vm49, 1, 0
  %v62 = vsel %vm50, 1, 0
  %v63 = vsel %vm51, 1, 0
  %v64 = vsel %vm52, 1, 0
  %v65 = vsel %vm53, 1, 0
  %66 = vset.pattern.permute.xlu0 0
  %67 = vperm.xlu0 %66, %v60
  %v68 = vpop.permute.xlu0 %67
  %69 = vset.pattern.permute.xlu0 0
  %70 = vperm.xlu0 %69, %v61
  %v71 = vpop.permute.xlu0 %70
  %72 = vset.pattern.permute.xlu0 0
  %73 = vperm.xlu0 %72, %v62
  %v74 = vpop.permute.xlu0 %73
  %75 = vset.pattern.permute.xlu0 0
  %76 = vperm.xlu0 %75, %v63
  %v77 = vpop.permute.xlu0 %76
  %78 = vset.pattern.permute.xlu0 0
  %79 = vperm.xlu0 %78, %v64
  %v80 = vpop.permute.xlu0 %79
  %81 = vset.pattern.permute.xlu0 0
  %82 = vperm.xlu0 %81, %v65
  %v83 = vpop.permute.xlu0 %82
  %vm84 = vcmp.eq.s32.totalorder %v68, 1
  %vm85 = vcmp.eq.s32.totalorder %v71, 1
  %vm86 = vcmp.eq.s32.totalorder %v74, 1
  %vm87 = vcmp.eq.s32.totalorder %v77, 1
  %vm88 = vcmp.eq.s32.totalorder %v80, 1
  %vm89 = vcmp.eq.s32.totalorder %v83, 1
  %v90 = vsel %vm84, %v54, 0.0
  %v91 = vsel %vm85, %v55, 0.0
  %v92 = vsel %vm86, %v56, 0.0
  %v93 = vsel %vm87, %v57, 0.0
  %v94 = vsel %vm88, %v58, 0.0
  %v95 = vsel %vm89, %v59, 0.0
  %v96 = vlaneseq
  %v97 = vshrl.u32 %v96, 7
  %v98 = vlaneseq
  %v99 = vshrl.u32 %v98, 7
  %v100 = vsub.s32 0, %v99
  %v101 = vrot.slane %v41, %v100
  %vm102 = vcmp.eq.s32.totalorder %v97, %v101
  %v103 = vsel %vm102, 1, 0
  %v104 = vcvt.s32.f32 %v103
  %v105 = vld [vmem:[%s9] sm:$0xff]
  %vm106 = vcmask 392192
  %v108 = vsel %vm106, %v104, 0
  %110 = vmatprep.subr.mxu0 0.0
  %111 = vmatpush1.msra.mxu0 %v90
  %112 = vmatprep.subr.mxu0 0.0
  %113 = vmatpush1.msra.mxu0 %v91
  %114 = vmatprep.subr.mxu0 0.0
  %115 = vmatpush1.msra.mxu0 %v92
  %116 = vmatprep.subr.mxu0 0.0
  %117 = vmatpush1.msra.mxu0 %v93
  %118 = vmatprep.subr.mxu0 0.0
  %119 = vmatpush1.msra.mxu0 %v94
  %120 = vmatprep.subr.mxu0 0.0
  %121 = vmatpush1.msra.mxu0 %v95
  %122 = vmatprep.subr.mxu0 0.0
  %123 = vmatpush1.msra.mxu0 0.0
  %124 = vmatprep.subr.mxu0 0.0
  %125 = vmatpush1.msra.mxu0 0.0
  %126 = vmatprep.subr.mxu0 0.0
  %127 = vmatpush1.msra.mxu0 0.0
  %128 = vmatprep.subr.mxu0 0.0
  %129 = vmatpush1.msra.mxu0 0.0
  %130 = vmatprep.subr.mxu0 0.0
  %131 = vmatpush1.msra.mxu0 0.0
  %132 = vmatprep.subr.mxu0 0.0
  %133 = vmatpush1.msra.mxu0 0.0
  %134 = vmatprep.subr.mxu0 0.0
  %135 = vmatpush1.msra.mxu0 0.0
  %136 = vmatprep.subr.mxu0 0.0
  %137 = vmatpush1.msra.mxu0 0.0
  %138 = vmatprep.subr.mxu0 0.0
  %139 = vmatpush1.msra.mxu0 0.0
  %140 = vmatprep.subr.mxu0 0.0
  %141 = vmatpush1.msra.mxu0 0.0
  %142 = vmatprep.subr.mxu0 0.0
  %143 = vmatpush1.msra.mxu0 0.0
  %144 = vmatprep.subr.mxu0 0.0
  %145 = vmatpush1.msra.mxu0 0.0
  %146 = vmatprep.subr.mxu0 0.0
  %147 = vmatpush1.msra.mxu0 0.0
  %148 = vmatprep.subr.mxu0 0.0
  %149 = vmatpush1.msra.mxu0 0.0
  %150 = vmatprep.subr.mxu0 0.0
  %151 = vmatpush1.msra.mxu0 0.0
  %152 = vmatprep.subr.mxu0 0.0
  %153 = vmatpush1.msra.mxu0 0.0
  %154 = vmatprep.subr.mxu0 0.0
  %155 = vmatpush1.msra.mxu0 0.0
  %156 = vmatprep.subr.mxu0 0.0
  %157 = vmatpush1.msra.mxu0 0.0
  %158 = vmatprep.subr.mxu0 0.0
  %159 = vmatpush1.msra.mxu0 0.0
  %160 = vmatprep.subr.mxu0 0.0
  %161 = vmatpush1.msra.mxu0 0.0
  %162 = vmatprep.subr.mxu0 0.0
  %163 = vmatpush1.msra.mxu0 0.0
  %164 = vmatprep.subr.mxu0 0.0
  %165 = vmatpush1.msra.mxu0 0.0
  %166 = vmatprep.subr.mxu0 0.0
  %167 = vmatpush1.msra.mxu0 0.0
  %168 = vmatprep.subr.mxu0 0.0
  %169 = vmatpush1.msra.mxu0 0.0
  %170 = vmatprep.subr.mxu0 0.0
  %171 = vmatpush1.msra.mxu0 0.0
  %172 = vmatprep.subr.mxu0 0.0
  %173 = vmatpush1.msra.mxu0 0.0
  %174 = vmatprep.mubr.f32.mxu0 0.0
  %175 = vmatmul.mubr.f32.gmra.mrb[0].mxu0 %v108
  %v176 = vpop.f32.mrb[0].mxu0
  %v177 = vadd.f32 0.0, %v176
  %v178 = vpop.f32.mrb[0].mxu0
  %179 = vdwg.mxu0
  %v180 = vadd.f32 %v105, %v177
  %181 = vst [vmem:[%s9] sm:$0xff] %v180
  %v182 = vld [vmem:[%s10] sm:$0xff]
  %v183 = vsel %vm106, %v104, 0.0
  %184 = vadd.xlane.f32.xlu0 %v183
  %v185 = vpop.xlane.xlu0 %184
  %v186 = vadd.f32 %v182, %v185
  %vm187 = vcmask 7168
  %188 = vst.msk [vmem:[%s10] sm:$0xff] %vm187, %v186
  // Predicated region
  $region42: #{context_forward.3} parent=0 // pred_check
    %p189 = pneg %p34
  $region43: #{context_forward.3} parent=0 // pred_check_branch
    %191 = sbr.rel (%p189) target = $region45
  $region44: #{context_forward.3} parent=0 // pred_region
    %v192 = vld [vmem:[%s10] sm:$0xff]
    %v193 = vmax.f32 %v192, 1.0
    %v194 = vrcp.pop %v193
    %v195 = vmul.f32 1.0, %v194
    %v196 = vld [vmem:[%s9] sm:$0xff]
    %198 = vset.pattern.permute.xlu0 0
    %199 = vperm.xlu0 %198, %v195
    %v200 = vpop.permute.xlu0 %199
    %v202 = vmul.f32 %v196, %v200
    %v203 = vld [vmem:[%s3] sm:$0xff]
    %v204 = vld [vmem:[%s3 + $0x8] sm:$0xff]
    %v205 = vld [vmem:[%s3 + $0x10] sm:$0xff]
    %v206 = vld [vmem:[%s3 + $0x18] sm:$0xff]
    %v207 = vld [vmem:[%s3 + $0x20] sm:$0xff]
    %v208 = vld [vmem:[%s3 + $0x28] sm:$0xff]
    %v209 = vld [vmem:[%s3 + $0x30] sm:$0xff]
    %v210 = vld [vmem:[%s3 + $0x38] sm:$0xff]
    %v211 = vld [vmem:[%s3 + $0x40] sm:$0xff]
    %v212 = vld [vmem:[%s3 + $0x48] sm:$0xff]
    %v213 = vld [vmem:[%s3 + $0x50] sm:$0xff]
    %v214 = vld [vmem:[%s3 + $0x58] sm:$0xff]
    %v215 = vld [vmem:[%s3 + $0x60] sm:$0xff]
    %v216 = vld [vmem:[%s3 + $0x68] sm:$0xff]
    %v217 = vld [vmem:[%s3 + $0x70] sm:$0xff]
    %v218 = vld [vmem:[%s3 + $0x78] sm:$0xff]
    %v219 = vld [vmem:[%s4] sm:$0x1]
    %v221 = vlaneseq
    %v222 = vshrl.u32 %v221, 7
    %v223 = vsub.s32 0, %v222
    %v224 = vrot.slane %v219, %v223
    %226 = vmatprep.subr.mxu0 0.0
    %227 = vmatpush1.msra.mxu0 %v203
    %228 = vmatprep.subr.mxu0 0.0
    %229 = vmatpush1.msra.mxu0 %v204
    %230 = vmatprep.subr.mxu0 0.0
    %231 = vmatpush1.msra.mxu0 %v205
    %232 = vmatprep.subr.mxu0 0.0
    %233 = vmatpush1.msra.mxu0 %v206
    %234 = vmatprep.subr.mxu0 0.0
    %235 = vmatpush1.msra.mxu0 %v207
    %236 = vmatprep.subr.mxu0 0.0
    %237 = vmatpush1.msra.mxu0 %v208
    %238 = vmatprep.subr.mxu0 0.0
    %239 = vmatpush1.msra.mxu0 %v209
    %240 = vmatprep.subr.mxu0 0.0
    %241 = vmatpush1.msra.mxu0 %v210
    %242 = vmatprep.subr.mxu0 0.0
    %243 = vmatpush1.msra.mxu0 %v211
    %244 = vmatprep.subr.mxu0 0.0
    %245 = vmatpush1.msra.mxu0 %v212
    %246 = vmatprep.subr.mxu0 0.0
    %247 = vmatpush1.msra.mxu0 %v213
    %248 = vmatprep.subr.mxu0 0.0
    %249 = vmatpush1.msra.mxu0 %v214
    %250 = vmatprep.subr.mxu0 0.0
    %251 = vmatpush1.msra.mxu0 %v215
    %252 = vmatprep.subr.mxu0 0.0
    %253 = vmatpush1.msra.mxu0 %v216
    %254 = vmatprep.subr.mxu0 0.0
    %255 = vmatpush1.msra.mxu0 %v217
    %256 = vmatprep.subr.mxu0 0.0
    %257 = vmatpush1.msra.mxu0 %v218
    %258 = vmatprep.subr.mxu0 0.0
    %259 = vmatpush1.msra.mxu0 0.0
    %260 = vmatprep.subr.mxu0 0.0
    %261 = vmatpush1.msra.mxu0 0.0
    %262 = vmatprep.subr.mxu0 0.0
    %263 = vmatpush1.msra.mxu0 0.0
    %264 = vmatprep.subr.mxu0 0.0
    %265 = vmatpush1.msra.mxu0 0.0
    %266 = vmatprep.subr.mxu0 0.0
    %267 = vmatpush1.msra.mxu0 0.0
    %268 = vmatprep.subr.mxu0 0.0
    %269 = vmatpush1.msra.mxu0 0.0
    %270 = vmatprep.subr.mxu0 0.0
    %271 = vmatpush1.msra.mxu0 0.0
    %272 = vmatprep.subr.mxu0 0.0
    %273 = vmatpush1.msra.mxu0 0.0
    %274 = vmatprep.subr.mxu0 0.0
    %275 = vmatpush1.msra.mxu0 0.0
    %276 = vmatprep.subr.mxu0 0.0
    %277 = vmatpush1.msra.mxu0 0.0
    %278 = vmatprep.subr.mxu0 0.0
    %279 = vmatpush1.msra.mxu0 0.0
    %280 = vmatprep.subr.mxu0 0.0
    %281 = vmatpush1.msra.mxu0 0.0
    %282 = vmatprep.subr.mxu0 0.0
    %283 = vmatpush1.msra.mxu0 0.0
    %284 = vmatprep.subr.mxu0 0.0
    %285 = vmatpush1.msra.mxu0 0.0
    %286 = vmatprep.subr.mxu0 0.0
    %287 = vmatpush1.msra.mxu0 0.0
    %288 = vmatprep.subr.mxu0 0.0
    %289 = vmatpush1.msra.mxu0 0.0
    %290 = vmatprep.mubr.f32.mxu0 0.0
    %291 = vmatmul.mubr.f32.gmra.mrb[0].mxu0 %v202
    %v292 = vpop.f32.mrb[0].mxu0
    %v293 = vadd.f32 %v224, %v292
    %v294 = vpop.f32.mrb[0].mxu0
    %295 = vdwg.mxu0
    %v296 = vmax.f32 %v293, 0.0
    %v297 = vld [vmem:[%s5] sm:$0xff]
    %v298 = vld [vmem:[%s5 + $0x8] sm:$0xff]
    %v299 = vld [vmem:[%s5 + $0x10] sm:$0xff]
    %v300 = vld [vmem:[%s5 + $0x18] sm:$0xff]
    %v301 = vld [vmem:[%s5 + $0x20] sm:$0xff]
    %v302 = vld [vmem:[%s5 + $0x28] sm:$0xff]
    %v303 = vld [vmem:[%s5 + $0x30] sm:$0xff]
    %v304 = vld [vmem:[%s5 + $0x38] sm:$0xff]
    %v305 = vld [vmem:[%s5 + $0x40] sm:$0xff]
    %v306 = vld [vmem:[%s5 + $0x48] sm:$0xff]
    %v307 = vld [vmem:[%s5 + $0x50] sm:$0xff]
    %v308 = vld [vmem:[%s5 + $0x58] sm:$0xff]
    %v309 = vld [vmem:[%s5 + $0x60] sm:$0xff]
    %v310 = vld [vmem:[%s5 + $0x68] sm:$0xff]
    %v311 = vld [vmem:[%s5 + $0x70] sm:$0xff]
    %v312 = vld [vmem:[%s5 + $0x78] sm:$0xff]
    %v313 = vld [vmem:[%s6] sm:$0x1]
    %v315 = vlaneseq
    %v316 = vshrl.u32 %v315, 7
    %v317 = vsub.s32 0, %v316
    %v318 = vrot.slane %v313, %v317
    %320 = vmatprep.subr.mxu0 0.0
    %321 = vmatpush1.msra.mxu0 %v297
    %322 = vmatprep.subr.mxu0 0.0
    %323 = vmatpush1.msra.mxu0 %v298
    %324 = vmatprep.subr.mxu0 0.0
    %325 = vmatpush1.msra.mxu0 %v299
    %326 = vmatprep.subr.mxu0 0.0
    %327 = vmatpush1.msra.mxu0 %v300
    %328 = vmatprep.subr.mxu0 0.0
    %329 = vmatpush1.msra.mxu0 %v301
    %330 = vmatprep.subr.mxu0 0.0
    %331 = vmatpush1.msra.mxu0 %v302
    %332 = vmatprep.subr.mxu0 0.0
    %333 = vmatpush1.msra.mxu0 %v303
    %334 = vmatprep.subr.mxu0 0.0
    %335 = vmatpush1.msra.mxu0 %v304
    %336 = vmatprep.subr.mxu0 0.0
    %337 = vmatpush1.msra.mxu0 %v305
    %338 = vmatprep.subr.mxu0 0.0
    %339 = vmatpush1.msra.mxu0 %v306
    %340 = vmatprep.subr.mxu0 0.0
    %341 = vmatpush1.msra.mxu0 %v307
    %342 = vmatprep.subr.mxu0 0.0
    %343 = vmatpush1.msra.mxu0 %v308
    %344 = vmatprep.subr.mxu0 0.0
    %345 = vmatpush1.msra.mxu0 %v309
    %346 = vmatprep.subr.mxu0 0.0
    %347 = vmatpush1.msra.mxu0 %v310
    %348 = vmatprep.subr.mxu0 0.0
    %349 = vmatpush1.msra.mxu0 %v311
    %350 = vmatprep.subr.mxu0 0.0
    %351 = vmatpush1.msra.mxu0 %v312
    %352 = vmatprep.subr.mxu0 0.0
    %353 = vmatpush1.msra.mxu0 0.0
    %354 = vmatprep.subr.mxu0 0.0
    %355 = vmatpush1.msra.mxu0 0.0
    %356 = vmatprep.subr.mxu0 0.0
    %357 = vmatpush1.msra.mxu0 0.0
    %358 = vmatprep.subr.mxu0 0.0
    %359 = vmatpush1.msra.mxu0 0.0
    %360 = vmatprep.subr.mxu0 0.0
    %361 = vmatpush1.msra.mxu0 0.0
    %362 = vmatprep.subr.mxu0 0.0
    %363 = vmatpush1.msra.mxu0 0.0
    %364 = vmatprep.subr.mxu0 0.0
    %365 = vmatpush1.msra.mxu0 0.0
    %366 = vmatprep.subr.mxu0 0.0
    %367 = vmatpush1.msra.mxu0 0.0
    %368 = vmatprep.subr.mxu0 0.0
    %369 = vmatpush1.msra.mxu0 0.0
    %370 = vmatprep.subr.mxu0 0.0
    %371 = vmatpush1.msra.mxu0 0.0
    %372 = vmatprep.subr.mxu0 0.0
    %373 = vmatpush1.msra.mxu0 0.0
    %374 = vmatprep.subr.mxu0 0.0
    %375 = vmatpush1.msra.mxu0 0.0
    %376 = vmatprep.subr.mxu0 0.0
    %377 = vmatpush1.msra.mxu0 0.0
    %378 = vmatprep.subr.mxu0 0.0
    %379 = vmatpush1.msra.mxu0 0.0
    %380 = vmatprep.subr.mxu0 0.0
    %381 = vmatpush1.msra.mxu0 0.0
    %382 = vmatprep.subr.mxu0 0.0
    %383 = vmatpush1.msra.mxu0 0.0
    %384 = vmatprep.mubr.f32.mxu0 0.0
    %385 = vmatmul.mubr.f32.gmra.mrb[0].mxu0 %v296
    %v386 = vpop.f32.mrb[0].mxu0
    %v387 = vadd.f32 %v318, %v386
    %v388 = vpop.f32.mrb[0].mxu0
    %389 = vdwg.mxu0
    %v390 = vmax.f32 %v387, 0.0
    %v391 = vld [vmem:[%s7] sm:$0xff]
    %v392 = vld [vmem:[%s7 + $0x8] sm:$0xff]
    %v393 = vld [vmem:[%s7 + $0x10] sm:$0xff]
    %v394 = vld [vmem:[%s7 + $0x18] sm:$0xff]
    %v395 = vld [vmem:[%s7 + $0x20] sm:$0xff]
    %v396 = vld [vmem:[%s7 + $0x28] sm:$0xff]
    %v397 = vld [vmem:[%s7 + $0x30] sm:$0xff]
    %v398 = vld [vmem:[%s7 + $0x38] sm:$0xff]
    %v399 = vld [vmem:[%s7 + $0x40] sm:$0xff]
    %v400 = vld [vmem:[%s7 + $0x48] sm:$0xff]
    %v401 = vld [vmem:[%s7 + $0x50] sm:$0xff]
    %v402 = vld [vmem:[%s7 + $0x58] sm:$0xff]
    %v403 = vld [vmem:[%s7 + $0x60] sm:$0xff]
    %v404 = vld [vmem:[%s7 + $0x68] sm:$0xff]
    %v405 = vld [vmem:[%s7 + $0x70] sm:$0xff]
    %v406 = vld [vmem:[%s7 + $0x78] sm:$0xff]
    %v407 = vld [vmem:[%s8] sm:$0x1]
    %v409 = vlaneseq
    %v410 = vshrl.u32 %v409, 7
    %v411 = vsub.s32 0, %v410
    %v412 = vrot.slane %v407, %v411
    %414 = vmatprep.subr.mxu0 0.0
    %415 = vmatpush1.msra.mxu0 %v391
    %416 = vmatprep.subr.mxu0 0.0
    %417 = vmatpush1.msra.mxu0 %v392
    %418 = vmatprep.subr.mxu0 0.0
    %419 = vmatpush1.msra.mxu0 %v393
    %420 = vmatprep.subr.mxu0 0.0
    %421 = vmatpush1.msra.mxu0 %v394
    %422 = vmatprep.subr.mxu0 0.0
    %423 = vmatpush1.msra.mxu0 %v395
    %424 = vmatprep.subr.mxu0 0.0
    %425 = vmatpush1.msra.mxu0 %v396
    %426 = vmatprep.subr.mxu0 0.0
    %427 = vmatpush1.msra.mxu0 %v397
    %428 = vmatprep.subr.mxu0 0.0
    %429 = vmatpush1.msra.mxu0 %v398
    %430 = vmatprep.subr.mxu0 0.0
    %431 = vmatpush1.msra.mxu0 %v399
    %432 = vmatprep.subr.mxu0 0.0
    %433 = vmatpush1.msra.mxu0 %v400
    %434 = vmatprep.subr.mxu0 0.0
    %435 = vmatpush1.msra.mxu0 %v401
    %436 = vmatprep.subr.mxu0 0.0
    %437 = vmatpush1.msra.mxu0 %v402
    %438 = vmatprep.subr.mxu0 0.0
    %439 = vmatpush1.msra.mxu0 %v403
    %440 = vmatprep.subr.mxu0 0.0
    %441 = vmatpush1.msra.mxu0 %v404
    %442 = vmatprep.subr.mxu0 0.0
    %443 = vmatpush1.msra.mxu0 %v405
    %444 = vmatprep.subr.mxu0 0.0
    %445 = vmatpush1.msra.mxu0 %v406
    %446 = vmatprep.subr.mxu0 0.0
    %447 = vmatpush1.msra.mxu0 0.0
    %448 = vmatprep.subr.mxu0 0.0
    %449 = vmatpush1.msra.mxu0 0.0
    %450 = vmatprep.subr.mxu0 0.0
    %451 = vmatpush1.msra.mxu0 0.0
    %452 = vmatprep.subr.mxu0 0.0
    %453 = vmatpush1.msra.mxu0 0.0
    %454 = vmatprep.subr.mxu0 0.0
    %455 = vmatpush1.msra.mxu0 0.0
    %456 = vmatprep.subr.mxu0 0.0
    %457 = vmatpush1.msra.mxu0 0.0
    %458 = vmatprep.subr.mxu0 0.0
    %459 = vmatpush1.msra.mxu0 0.0
    %460 = vmatprep.subr.mxu0 0.0
    %461 = vmatpush1.msra.mxu0 0.0
    %462 = vmatprep.subr.mxu0 0.0
    %463 = vmatpush1.msra.mxu0 0.0
    %464 = vmatprep.subr.mxu0 0.0
    %465 = vmatpush1.msra.mxu0 0.0
    %466 = vmatprep.subr.mxu0 0.0
    %467 = vmatpush1.msra.mxu0 0.0
    %468 = vmatprep.subr.mxu0 0.0
    %469 = vmatpush1.msra.mxu0 0.0
    %470 = vmatprep.subr.mxu0 0.0
    %471 = vmatpush1.msra.mxu0 0.0
    %472 = vmatprep.subr.mxu0 0.0
    %473 = vmatpush1.msra.mxu0 0.0
    %474 = vmatprep.subr.mxu0 0.0
    %475 = vmatpush1.msra.mxu0 0.0
    %476 = vmatprep.subr.mxu0 0.0
    %477 = vmatpush1.msra.mxu0 0.0
    %478 = vmatprep.mubr.f32.mxu0 0.0
    %479 = vmatmul.mubr.f32.gmra.mrb[0].mxu0 %v390
    %v480 = vpop.f32.mrb[0].mxu0
    %v481 = vadd.f32 %v412, %v480
    %v482 = vpop.f32.mrb[0].mxu0
    %483 = vdwg.mxu0
    %v484 = vxor.u32 %v481, 2147483648
    %v485 = vmul.f32 %v484, 1.442695
    %v486 = vpow.pop %v485
    %v487 = vadd.f32 %v486, 1.0
    %v488 = vrcp.pop %v487
    %v489 = vmul.f32 1.0, %v488
    %490 = vst [vmem:[%s9] sm:$0xff] %v489
    %491 = vst.msk [vmem:[%s10] sm:$0xff] %vm187, %v195
  $region45: #{context_forward.3} parent=0 // pred_fallthru
    _
  // Predicated region
  $region46: #{context_forward.3} parent=0 // pred_check
    _
  $region47: #{context_forward.3} parent=0 // pred_check_branch
    %493 = sbr.rel (0) target = $region49
  $region48: #{context_forward.3} parent=0 // pred_region
    _
  $region49: #{context_forward.3} parent=0 // pred_fallthru
    _
  // Predicated region
  $region50: #{context_forward.3} parent=0 // pred_check
    _
  $region51: #{context_forward.3} parent=0 // pred_check_branch
    %495 = sbr.rel (0) target = $region53
  $region52: #{context_forward.3} parent=0 // pred_region
    _
  $region53: #{context_forward.3} parent=0 // pred_fallthru
    _
  // Predicated region
  $region54: #{context_forward.3} parent=0 // pred_check
    _
  $region55: #{context_forward.3} parent=0 // pred_check_branch
    %497 = sbr.rel (0) target = $region57
  $region56: #{context_forward.3} parent=0 // pred_region
    _
  $region57: #{context_forward.3} parent=0 // pred_fallthru
    _
  // Predicated region
  $region58: #{context_forward.3} parent=0 // pred_check
    _
  $region59: #{context_forward.3} parent=0 // pred_check_branch
    %499 = sbr.rel (0) target = $region61
  $region60: #{context_forward.3} parent=0 // pred_region
    _
  $region61: #{context_forward.3} parent=0 // pred_fallthru
    _

// kernel: context_forward.4
$region0: #{context_forward.4}
  #allocation0 [shape = 'u32[]', space=smem, size = 0x4, offset = 0x4, fixed_abs, tag = 'smem constant byte address 0x4 - core index']
  #allocation1 [shape = 'u32[144,128]{1,0:T(1,128)}', space=vmem, size = 0x12000, scoped, tag = 'internal scratch']
  %s0 = inlined_call_operand.vmem [shape: s32[1,48], index: 0, kind: input, shape index: {}]
  %s1 = inlined_call_operand.vmem [shape: s32[48,1], index: 1, kind: input, shape index: {}]
  %s2 = inlined_call_operand.vmem [shape: f32[48,128], index: 2, kind: input, shape index: {}]
  %s3 = inlined_call_operand.vmem [shape: f32[8,128], index: 3, kind: input, shape index: {}]
  %s4 = inlined_call_operand.vmem [shape: f32[8,1], index: 4, kind: input, shape index: {}]
  %s5 = inlined_call_operand.vmem [shape: f32[128,128], index: 5, kind: input, shape index: {}]
  %s6 = inlined_call_operand.vmem [shape: f32[1,128], index: 6, kind: input, shape index: {}]
  %s7 = inlined_call_operand.vmem [shape: f32[128,128], index: 7, kind: input, shape index: {}]
  %s8 = inlined_call_operand.vmem [shape: f32[1,128], index: 8, kind: input, shape index: {}]
  %s9 = inlined_call_operand.vmem [shape: f32[128,128], index: 9, kind: input, shape index: {}]
  %s10 = inlined_call_operand.vmem [shape: f32[1,128], index: 10, kind: input, shape index: {}]
  %s11 = inlined_call_operand.hbm [shape: f32[48,128], index: 11, kind: output, shape index: {0}]
  %s12 = inlined_call_operand.vmem [shape: f32[8,128], index: 12, kind: output, shape index: {1}]
  %13 = xla_tuple %s11, %s12
  %s14 = sld [smem:[#allocation0]]
  $region70: #{context_forward.4} parent=0
    _
  %s16 = ssub.s32 1, %s14
  %s17 = scalar_select 0, %s16, %s14
  $region1: #{context_forward.4} parent=0
    #allocation2 [shape = 'u8[24576]{0}', space=vmem, size = 0x6000, scoped, tag = 'output window, operand 0, single buffered']
    #allocation3 [shape = 's32[1]{0}', space=sflag, size = 0x4, scoped, tag = 'scoped memory for context_forward.4']
    %18 = vsyncpa [#allocation3], 0
    // Predicated region
    $region2: #{context_forward.4} parent=1 // pred_check
      _
    $region3: #{context_forward.4} parent=1 // pred_check_branch
      %20 = sbr.rel (0) target = $region5
    $region4: #{context_forward.4} parent=1 // pred_region
      _
    $region5: #{context_forward.4} parent=1 // pred_fallthru
      _
    // Predicated region
    $region6: #{context_forward.4} parent=1 // pred_check
      _
    $region7: #{context_forward.4} parent=1 // pred_check_branch
      %22 = sbr.rel (0) target = $region9
    $region8: #{context_forward.4} parent=1 // pred_region
      _
    $region9: #{context_forward.4} parent=1 // pred_fallthru
      _
    // Predicated region
    $region10: #{context_forward.4} parent=1 // pred_check
      _
    $region11: #{context_forward.4} parent=1 // pred_check_branch
      %24 = sbr.rel (0) target = $region13
    $region12: #{context_forward.4} parent=1 // pred_region
      _
    $region13: #{context_forward.4} parent=1 // pred_fallthru
      _
    // Predicated region
    $region14: #{context_forward.4} parent=1 // pred_check
      _
    $region15: #{context_forward.4} parent=1 // pred_check_branch
      %26 = sbr.rel (0) target = $region17
    $region16: #{context_forward.4} parent=1 // pred_region
      _
    $region17: #{context_forward.4} parent=1 // pred_fallthru
      _
    // Predicated region
    $region18: #{context_forward.4} parent=1 // pred_check
      _
    $region19: #{context_forward.4} parent=1 // pred_check_branch
      %28 = sbr.rel (0) target = $region21
    $region20: #{context_forward.4} parent=1 // pred_region
      _
    $region21: #{context_forward.4} parent=1 // pred_fallthru
      _
    // Predicated region
    $region22: #{context_forward.4} parent=1 // pred_check
      _
    $region23: #{context_forward.4} parent=1 // pred_check_branch
      %30 = sbr.rel (0) target = $region25
    $region24: #{context_forward.4} parent=1 // pred_region
      _
    $region25: #{context_forward.4} parent=1 // pred_fallthru
      _
    // Predicated region
    $region26: #{context_forward.4} parent=1 // pred_check
      _
    $region27: #{context_forward.4} parent=1 // pred_check_branch
      %32 = sbr.rel (0) target = $region29
    $region28: #{context_forward.4} parent=1 // pred_region
      _
    $region29: #{context_forward.4} parent=1 // pred_fallthru
      _
    // Predicated region
    $region30: #{context_forward.4} parent=1 // pred_check
      _
    $region31: #{context_forward.4} parent=1 // pred_check_branch
      %34 = sbr.rel (0) target = $region33
    $region32: #{context_forward.4} parent=1 // pred_region
      _
    $region33: #{context_forward.4} parent=1 // pred_fallthru
      _
    // Predicated region
    $region34: #{context_forward.4} parent=1 // pred_check
      _
    $region35: #{context_forward.4} parent=1 // pred_check_branch
      %36 = sbr.rel (0) target = $region37
    $region36: #{context_forward.4} parent=1 // pred_region
      _
    $region37: #{context_forward.4} parent=1 // pred_fallthru
      _
    // Predicated region
    $region38: #{context_forward.4} parent=1 // pred_check
      _
    $region39: #{context_forward.4} parent=1 // pred_check_branch
      %38 = sbr.rel (0) target = $region41
    $region40: #{context_forward.4} parent=1 // pred_region
      _
    $region41: #{context_forward.4} parent=1 // pred_fallthru
      _
    // Predicated region
    $region42: #{context_forward.4} parent=1 // pred_check
      _
    $region43: #{context_forward.4} parent=1 // pred_check_branch
      %40 = sbr.rel (0) target = $region45
    $region44: #{context_forward.4} parent=1 // pred_region
      _
    $region45: #{context_forward.4} parent=1 // pred_fallthru
      _
    %p41 = scmp.eq.s32.totalorder 0, 0
    // Predicated region
    $region46: #{context_forward.4} parent=1 // pred_check
      %p42 = pneg %p41
    $region47: #{context_forward.4} parent=1 // pred_check_branch
      %44 = sbr.rel (%p42) target = $region49
    $region48: #{context_forward.4} parent=1 // pred_region
      %45 = vst [vmem:[%s12] sm:$0xff] 0.0
    $region49: #{context_forward.4} parent=1 // pred_fallthru
      _
    %v46 = vld [vmem:[%s0] sm:$0x1]
    %v47 = vld [vmem:[%s1] sm:$0xff]
    %v48 = vld [vmem:[%s1 + $0x8] sm:$0xff]
    %v49 = vld [vmem:[%s1 + $0x10] sm:$0xff]
    %v50 = vld [vmem:[%s1 + $0x18] sm:$0xff]
    %v51 = vld [vmem:[%s1 + $0x20] sm:$0xff]
    %v52 = vld [vmem:[%s1 + $0x28] sm:$0xff]
    %vm53 = vcmp.ge.s32.totalorder %v47, 0
    %vm54 = vcmp.ge.s32.totalorder %v48, 0
    %vm55 = vcmp.ge.s32.totalorder %v49, 0
    %vm56 = vcmp.ge.s32.totalorder %v50, 0
    %vm57 = vcmp.ge.s32.totalorder %v51, 0
    %vm58 = vcmp.ge.s32.totalorder %v52, 0
    %v59 = vld [vmem:[%s2] sm:$0xff]
    %v60 = vld [vmem:[%s2 + $0x8] sm:$0xff]
    %v61 = vld [vmem:[%s2 + $0x10] sm:$0xff]
    %v62 = vld [vmem:[%s2 + $0x18] sm:$0xff]
    %v63 = vld [vmem:[%s2 + $0x20] sm:$0xff]
    %v64 = vld [vmem:[%s2 + $0x28] sm:$0xff]
    %v65 = vsel %vm53, 1, 0
    %v66 = vsel %vm54, 1, 0
    %v67 = vsel %vm55, 1, 0
    %v68 = vsel %vm56, 1, 0
    %v69 = vsel %vm57, 1, 0
    %v70 = vsel %vm58, 1, 0
    %71 = vset.pattern.permute.xlu0 0
    %72 = vperm.xlu0 %71, %v65
    %v73 = vpop.permute.xlu0 %72
    %74 = vset.pattern.permute.xlu0 0
    %75 = vperm.xlu0 %74, %v66
    %v76 = vpop.permute.xlu0 %75
    %77 = vset.pattern.permute.xlu0 0
    %78 = vperm.xlu0 %77, %v67
    %v79 = vpop.permute.xlu0 %78
    %80 = vset.pattern.permute.xlu0 0
    %81 = vperm.xlu0 %80, %v68
    %v82 = vpop.permute.xlu0 %81
    %83 = vset.pattern.permute.xlu0 0
    %84 = vperm.xlu0 %83, %v69
    %v85 = vpop.permute.xlu0 %84
    %86 = vset.pattern.permute.xlu0 0
    %87 = vperm.xlu0 %86, %v70
    %v88 = vpop.permute.xlu0 %87
    %vm89 = vcmp.eq.s32.totalorder %v73, 1
    %vm90 = vcmp.eq.s32.totalorder %v76, 1
    %vm91 = vcmp.eq.s32.totalorder %v79, 1
    %vm92 = vcmp.eq.s32.totalorder %v82, 1
    %vm93 = vcmp.eq.s32.totalorder %v85, 1
    %vm94 = vcmp.eq.s32.totalorder %v88, 1
    %v95 = vsel %vm89, %v59, 0.0
    %v96 = vsel %vm90, %v60, 0.0
    %v97 = vsel %vm91, %v61, 0.0
    %v98 = vsel %vm92, %v62, 0.0
    %v99 = vsel %vm93, %v63, 0.0
    %v100 = vsel %vm94, %v64, 0.0
    %v101 = vlaneseq
    %v102 = vand.u32 %v101, 127
    %103 = vset.pattern.permute.xlu0 0
    %104 = vperm.xlu0 %103, %v47
    %v105 = vpop.permute.xlu0 %104
    %106 = vset.pattern.permute.xlu0 0
    %107 = vperm.xlu0 %106, %v48
    %v108 = vpop.permute.xlu0 %107
    %109 = vset.pattern.permute.xlu0 0
    %110 = vperm.xlu0 %109, %v49
    %v111 = vpop.permute.xlu0 %110
    %112 = vset.pattern.permute.xlu0 0
    %113 = vperm.xlu0 %112, %v50
    %v114 = vpop.permute.xlu0 %113
    %115 = vset.pattern.permute.xlu0 0
    %116 = vperm.xlu0 %115, %v51
    %v117 = vpop.permute.xlu0 %116
    %118 = vset.pattern.permute.xlu0 0
    %119 = vperm.xlu0 %118, %v52
    %v120 = vpop.permute.xlu0 %119
    %vm121 = vcmp.eq.s32.totalorder %v102, %v105
    %vm122 = vcmp.eq.s32.totalorder %v102, %v108
    %vm123 = vcmp.eq.s32.totalorder %v102, %v111
    %vm124 = vcmp.eq.s32.totalorder %v102, %v114
    %vm125 = vcmp.eq.s32.totalorder %v102, %v117
    %vm126 = vcmp.eq.s32.totalorder %v102, %v120
    %v127 = vsel %vm121, 1, 0
    %v128 = vsel %vm122, 1, 0
    %v129 = vsel %vm123, 1, 0
    %v130 = vsel %vm124, 1, 0
    %v131 = vsel %vm125, 1, 0
    %v132 = vsel %vm126, 1, 0
    %v133 = vcvt.s32.f32 %v127
    %v134 = vcvt.s32.f32 %v128
    %v135 = vcvt.s32.f32 %v129
    %v136 = vcvt.s32.f32 %v130
    %v137 = vcvt.s32.f32 %v131
    %v138 = vcvt.s32.f32 %v132
    %v139 = vld [vmem:[%s3] sm:$0xff]
    %vm140 = vcmask 64512
    %v142 = vsel %vm140, %v133, 0
    %v145 = vsel %vm140, %v134, 0
    %v148 = vsel %vm140, %v135, 0
    %v151 = vsel %vm140, %v136, 0
    %v154 = vsel %vm140, %v137, 0
    %v157 = vsel %vm140, %v138, 0
    %159 = vmatprep.subr.mxu0 0.0
    %160 = vmatpush1.msra.mxu0 %v139
    %161 = vmatprep.subr.mxu0 0.0
    %162 = vmatpush1.msra.mxu0 0.0
    %163 = vmatprep.subr.mxu0 0.0
    %164 = vmatpush1.msra.mxu0 0.0
    %165 = vmatprep.subr.mxu0 0.0
    %166 = vmatpush1.msra.mxu0 0.0
    %167 = vmatprep.subr.mxu0 0.0
    %168 = vmatpush1.msra.mxu0 0.0
    %169 = vmatprep.subr.mxu0 0.0
    %170 = vmatpush1.msra.mxu0 0.0
    %171 = vmatprep.subr.mxu0 0.0
    %172 = vmatpush1.msra.mxu0 0.0
    %173 = vmatprep.subr.mxu0 0.0
    %174 = vmatpush1.msra.mxu0 0.0
    %175 = vmatprep.subr.mxu0 0.0
    %176 = vmatpush1.msra.mxu0 0.0
    %177 = vmatprep.subr.mxu0 0.0
    %178 = vmatpush1.msra.mxu0 0.0
    %179 = vmatprep.subr.mxu0 0.0
    %180 = vmatpush1.msra.mxu0 0.0
    %181 = vmatprep.subr.mxu0 0.0
    %182 = vmatpush1.msra.mxu0 0.0
    %183 = vmatprep.subr.mxu0 0.0
    %184 = vmatpush1.msra.mxu0 0.0
    %185 = vmatprep.subr.mxu0 0.0
    %186 = vmatpush1.msra.mxu0 0.0
    %187 = vmatprep.subr.mxu0 0.0
    %188 = vmatpush1.msra.mxu0 0.0
    %189 = vmatprep.subr.mxu0 0.0
    %190 = vmatpush1.msra.mxu0 0.0
    %191 = vmatprep.subr.mxu0 0.0
    %192 = vmatpush1.msra.mxu0 0.0
    %193 = vmatprep.subr.mxu0 0.0
    %194 = vmatpush1.msra.mxu0 0.0
    %195 = vmatprep.subr.mxu0 0.0
    %196 = vmatpush1.msra.mxu0 0.0
    %197 = vmatprep.subr.mxu0 0.0
    %198 = vmatpush1.msra.mxu0 0.0
    %199 = vmatprep.subr.mxu0 0.0
    %200 = vmatpush1.msra.mxu0 0.0
    %201 = vmatprep.subr.mxu0 0.0
    %202 = vmatpush1.msra.mxu0 0.0
    %203 = vmatprep.subr.mxu0 0.0
    %204 = vmatpush1.msra.mxu0 0.0
    %205 = vmatprep.subr.mxu0 0.0
    %206 = vmatpush1.msra.mxu0 0.0
    %207 = vmatprep.subr.mxu0 0.0
    %208 = vmatpush1.msra.mxu0 0.0
    %209 = vmatprep.subr.mxu0 0.0
    %210 = vmatpush1.msra.mxu0 0.0
    %211 = vmatprep.subr.mxu0 0.0
    %212 = vmatpush1.msra.mxu0 0.0
    %213 = vmatprep.subr.mxu0 0.0
    %214 = vmatpush1.msra.mxu0 0.0
    %215 = vmatprep.subr.mxu0 0.0
    %216 = vmatpush1.msra.mxu0 0.0
    %217 = vmatprep.subr.mxu0 0.0
    %218 = vmatpush1.msra.mxu0 0.0
    %219 = vmatprep.subr.mxu0 0.0
    %220 = vmatpush1.msra.mxu0 0.0
    %221 = vmatprep.subr.mxu0 0.0
    %222 = vmatpush1.msra.mxu0 0.0
    %223 = vmatprep.mubr.f32.mxu0 0.0
    %224 = vmatmul.mubr.f32.gmra.mrb[0].mxu0 %v142
    %v225 = vpop.f32.mrb[0].mxu0
    %v226 = vadd.f32 0.0, %v225
    %v227 = vpop.f32.mrb[0].mxu0
    %228 = vmatprep.mubr.f32.mxu0 0.0
    %229 = vmatmul.mubr.f32.gmra.mrb[0].mxu0 %v145
    %v230 = vpop.f32.mrb[0].mxu0
    %v231 = vadd.f32 0.0, %v230
    %v232 = vpop.f32.mrb[0].mxu0
    %233 = vmatprep.mubr.f32.mxu0 0.0
    %234 = vmatmul.mubr.f32.gmra.mrb[0].mxu0 %v148
    %v235 = vpop.f32.mrb[0].mxu0
    %v236 = vadd.f32 0.0, %v235
    %v237 = vpop.f32.mrb[0].mxu0
    %238 = vmatprep.mubr.f32.mxu0 0.0
    %239 = vmatmul.mubr.f32.gmra.mrb[0].mxu0 %v151
    %v240 = vpop.f32.mrb[0].mxu0
    %v241 = vadd.f32 0.0, %v240
    %v242 = vpop.f32.mrb[0].mxu0
    %243 = vmatprep.mubr.f32.mxu0 0.0
    %244 = vmatmul.mubr.f32.gmra.mrb[0].mxu0 %v154
    %v245 = vpop.f32.mrb[0].mxu0
    %v246 = vadd.f32 0.0, %v245
    %v247 = vpop.f32.mrb[0].mxu0
    %248 = vmatprep.mubr.f32.mxu0 0.0
    %249 = vmatmul.mubr.f32.gmra.mrb[0].mxu0 %v157
    %v250 = vpop.f32.mrb[0].mxu0
    %v251 = vadd.f32 0.0, %v250
    %v252 = vpop.f32.mrb[0].mxu0
    %253 = vdwg.mxu0
    %v254 = vmul.f32 %v95, %v226
    %v255 = vmul.f32 %v96, %v231
    %v256 = vmul.f32 %v97, %v236
    %v257 = vmul.f32 %v98, %v241
    %v258 = vmul.f32 %v99, %v246
    %v259 = vmul.f32 %v100, %v251
    %260 = vst [vmem:[#allocation2] sm:$0xff] %v254
    %261 = vst [vmem:[#allocation2 + $0x8] sm:$0xff] %v255
    %262 = vst [vmem:[#allocation2 + $0x10] sm:$0xff] %v256
    %263 = vst [vmem:[#allocation2 + $0x18] sm:$0xff] %v257
    %264 = vst [vmem:[#allocation2 + $0x20] sm:$0xff] %v258
    %265 = vst [vmem:[#allocation2 + $0x28] sm:$0xff] %v259
    %v266 = vlaneseq
    %v267 = vshrl.u32 %v266, 7
    %v268 = vlaneseq
    %v269 = vshrl.u32 %v268, 7
    %v270 = vsub.s32 0, %v269
    %v271 = vrot.slane %v46, %v270
    %vm272 = vcmp.eq.s32.totalorder %v267, %v271
    %v273 = vsel %vm272, 1, 0
    %v274 = vcvt.s32.f32 %v273
    %v275 = vld [vmem:[%s12] sm:$0xff]
    %vm276 = vcmask 392192
    %v278 = vsel %vm276, %v274, 0
    %280 = vmatprep.subr.mxu0 0.0
    %281 = vmatpush1.msra.mxu0 %v254
    %282 = vmatprep.subr.mxu0 0.0
    %283 = vmatpush1.msra.mxu0 %v255
    %284 = vmatprep.subr.mxu0 0.0
    %285 = vmatpush1.msra.mxu0 %v256
    %286 = vmatprep.subr.mxu0 0.0
    %287 = vmatpush1.msra.mxu0 %v257
    %288 = vmatprep.subr.mxu0 0.0
    %289 = vmatpush1.msra.mxu0 %v258
    %290 = vmatprep.subr.mxu0 0.0
    %291 = vmatpush1.msra.mxu0 %v259
    %292 = vmatprep.subr.mxu0 0.0
    %293 = vmatpush1.msra.mxu0 0.0
    %294 = vmatprep.subr.mxu0 0.0
    %295 = vmatpush1.msra.mxu0 0.0
    %296 = vmatprep.subr.mxu0 0.0
    %297 = vmatpush1.msra.mxu0 0.0
    %298 = vmatprep.subr.mxu0 0.0
    %299 = vmatpush1.msra.mxu0 0.0
    %300 = vmatprep.subr.mxu0 0.0
    %301 = vmatpush1.msra.mxu0 0.0
    %302 = vmatprep.subr.mxu0 0.0
    %303 = vmatpush1.msra.mxu0 0.0
    %304 = vmatprep.subr.mxu0 0.0
    %305 = vmatpush1.msra.mxu0 0.0
    %306 = vmatprep.subr.mxu0 0.0
    %307 = vmatpush1.msra.mxu0 0.0
    %308 = vmatprep.subr.mxu0 0.0
    %309 = vmatpush1.msra.mxu0 0.0
    %310 = vmatprep.subr.mxu0 0.0
    %311 = vmatpush1.msra.mxu0 0.0
    %312 = vmatprep.subr.mxu0 0.0
    %313 = vmatpush1.msra.mxu0 0.0
    %314 = vmatprep.subr.mxu0 0.0
    %315 = vmatpush1.msra.mxu0 0.0
    %316 = vmatprep.subr.mxu0 0.0
    %317 = vmatpush1.msra.mxu0 0.0
    %318 = vmatprep.subr.mxu0 0.0
    %319 = vmatpush1.msra.mxu0 0.0
    %320 = vmatprep.subr.mxu0 0.0
    %321 = vmatpush1.msra.mxu0 0.0
    %322 = vmatprep.subr.mxu0 0.0
    %323 = vmatpush1.msra.mxu0 0.0
    %324 = vmatprep.subr.mxu0 0.0
    %325 = vmatpush1.msra.mxu0 0.0
    %326 = vmatprep.subr.mxu0 0.0
    %327 = vmatpush1.msra.mxu0 0.0
    %328 = vmatprep.subr.mxu0 0.0
    %329 = vmatpush1.msra.mxu0 0.0
    %330 = vmatprep.subr.mxu0 0.0
    %331 = vmatpush1.msra.mxu0 0.0
    %332 = vmatprep.subr.mxu0 0.0
    %333 = vmatpush1.msra.mxu0 0.0
    %334 = vmatprep.subr.mxu0 0.0
    %335 = vmatpush1.msra.mxu0 0.0
    %336 = vmatprep.subr.mxu0 0.0
    %337 = vmatpush1.msra.mxu0 0.0
    %338 = vmatprep.subr.mxu0 0.0
    %339 = vmatpush1.msra.mxu0 0.0
    %340 = vmatprep.subr.mxu0 0.0
    %341 = vmatpush1.msra.mxu0 0.0
    %342 = vmatprep.subr.mxu0 0.0
    %343 = vmatpush1.msra.mxu0 0.0
    %344 = vmatprep.mubr.f32.mxu0 0.0
    %345 = vmatmul.mubr.f32.gmra.mrb[0].mxu0 %v278
    %v346 = vpop.f32.mrb[0].mxu0
    %v347 = vadd.f32 0.0, %v346
    %v348 = vpop.f32.mrb[0].mxu0
    %349 = vdwg.mxu0
    %v350 = vadd.f32 %v275, %v347
    %351 = vst [vmem:[%s12] sm:$0xff] %v350
    // Predicated region
    $region50: #{context_forward.4} parent=1 // pred_check
      %p352 = pneg %p41
    $region51: #{context_forward.4} parent=1 // pred_check_branch
      %354 = sbr.rel (%p352) target = $region53
    $region52: #{context_forward.4} parent=1 // pred_region
      %v355 = vld [vmem:[%s12] sm:$0xff]
      %v356 = vld [vmem:[%s4] sm:$0xff]
      %358 = vset.pattern.permute.xlu0 0
      %359 = vperm.xlu0 %358, %v356
      %v360 = vpop.permute.xlu0 %359
      %v362 = vmul.f32 %v355, %v360
      %v363 = vld [vmem:[%s5] sm:$0xff]
      %v364 = vld [vmem:[%s5 + $0x8] sm:$0xff]
      %v365 = vld [vmem:[%s5 + $0x10] sm:$0xff]
      %v366 = vld [vmem:[%s5 + $0x18] sm:$0xff]
      %v367 = vld [vmem:[%s5 + $0x20] sm:$0xff]
      %v368 = vld [vmem:[%s5 + $0x28] sm:$0xff]
      %v369 = vld [vmem:[%s5 + $0x30] sm:$0xff]
      %v370 = vld [vmem:[%s5 + $0x38] sm:$0xff]
      %v371 = vld [vmem:[%s5 + $0x40] sm:$0xff]
      %v372 = vld [vmem:[%s5 + $0x48] sm:$0xff]
      %v373 = vld [vmem:[%s5 + $0x50] sm:$0xff]
      %v374 = vld [vmem:[%s5 + $0x58] sm:$0xff]
      %v375 = vld [vmem:[%s5 + $0x60] sm:$0xff]
      %v376 = vld [vmem:[%s5 + $0x68] sm:$0xff]
      %v377 = vld [vmem:[%s5 + $0x70] sm:$0xff]
      %v378 = vld [vmem:[%s5 + $0x78] sm:$0xff]
      %v379 = vld [vmem:[%s6] sm:$0x1]
      %v381 = vlaneseq
      %v382 = vshrl.u32 %v381, 7
      %v383 = vsub.s32 0, %v382
      %v384 = vrot.slane %v379, %v383
      %386 = vmatprep.subr.mxu0 0.0
      %387 = vmatpush1.msra.mxu0 %v363
      %388 = vmatprep.subr.mxu0 0.0
      %389 = vmatpush1.msra.mxu0 %v364
      %390 = vmatprep.subr.mxu0 0.0
      %391 = vmatpush1.msra.mxu0 %v365
      %392 = vmatprep.subr.mxu0 0.0
      %393 = vmatpush1.msra.mxu0 %v366
      %394 = vmatprep.subr.mxu0 0.0
      %395 = vmatpush1.msra.mxu0 %v367
      %396 = vmatprep.subr.mxu0 0.0
      %397 = vmatpush1.msra.mxu0 %v368
      %398 = vmatprep.subr.mxu0 0.0
      %399 = vmatpush1.msra.mxu0 %v369
      %400 = vmatprep.subr.mxu0 0.0
      %401 = vmatpush1.msra.mxu0 %v370
      %402 = vmatprep.subr.mxu0 0.0
      %403 = vmatpush1.msra.mxu0 %v371
      %404 = vmatprep.subr.mxu0 0.0
      %405 = vmatpush1.msra.mxu0 %v372
      %406 = vmatprep.subr.mxu0 0.0
      %407 = vmatpush1.msra.mxu0 %v373
      %408 = vmatprep.subr.mxu0 0.0
      %409 = vmatpush1.msra.mxu0 %v374
      %410 = vmatprep.subr.mxu0 0.0
      %411 = vmatpush1.msra.mxu0 %v375
      %412 = vmatprep.subr.mxu0 0.0
      %413 = vmatpush1.msra.mxu0 %v376
      %414 = vmatprep.subr.mxu0 0.0
      %415 = vmatpush1.msra.mxu0 %v377
      %416 = vmatprep.subr.mxu0 0.0
      %417 = vmatpush1.msra.mxu0 %v378
      %418 = vmatprep.subr.mxu0 0.0
      %419 = vmatpush1.msra.mxu0 0.0
      %420 = vmatprep.subr.mxu0 0.0
      %421 = vmatpush1.msra.mxu0 0.0
      %422 = vmatprep.subr.mxu0 0.0
      %423 = vmatpush1.msra.mxu0 0.0
      %424 = vmatprep.subr.mxu0 0.0
      %425 = vmatpush1.msra.mxu0 0.0
      %426 = vmatprep.subr.mxu0 0.0
      %427 = vmatpush1.msra.mxu0 0.0
      %428 = vmatprep.subr.mxu0 0.0
      %429 = vmatpush1.msra.mxu0 0.0
      %430 = vmatprep.subr.mxu0 0.0
      %431 = vmatpush1.msra.mxu0 0.0
      %432 = vmatprep.subr.mxu0 0.0
      %433 = vmatpush1.msra.mxu0 0.0
      %434 = vmatprep.subr.mxu0 0.0
      %435 = vmatpush1.msra.mxu0 0.0
      %436 = vmatprep.subr.mxu0 0.0
      %437 = vmatpush1.msra.mxu0 0.0
      %438 = vmatprep.subr.mxu0 0.0
      %439 = vmatpush1.msra.mxu0 0.0
      %440 = vmatprep.subr.mxu0 0.0
      %441 = vmatpush1.msra.mxu0 0.0
      %442 = vmatprep.subr.mxu0 0.0
      %443 = vmatpush1.msra.mxu0 0.0
      %444 = vmatprep.subr.mxu0 0.0
      %445 = vmatpush1.msra.mxu0 0.0
      %446 = vmatprep.subr.mxu0 0.0
      %447 = vmatpush1.msra.mxu0 0.0
      %448 = vmatprep.subr.mxu0 0.0
      %449 = vmatpush1.msra.mxu0 0.0
      %450 = vmatprep.mubr.f32.mxu0 0.0
      %451 = vmatmul.mubr.f32.gmra.mrb[0].mxu0 %v362
      %v452 = vpop.f32.mrb[0].mxu0
      %v453 = vadd.f32 %v384, %v452
      %v454 = vpop.f32.mrb[0].mxu0
      %455 = vdwg.mxu0
      %v456 = vmax.f32 %v453, 0.0
      %v457 = vld [vmem:[%s7] sm:$0xff]
      %v458 = vld [vmem:[%s7 + $0x8] sm:$0xff]
      %v459 = vld [vmem:[%s7 + $0x10] sm:$0xff]
      %v460 = vld [vmem:[%s7 + $0x18] sm:$0xff]
      %v461 = vld [vmem:[%s7 + $0x20] sm:$0xff]
      %v462 = vld [vmem:[%s7 + $0x28] sm:$0xff]
      %v463 = vld [vmem:[%s7 + $0x30] sm:$0xff]
      %v464 = vld [vmem:[%s7 + $0x38] sm:$0xff]
      %v465 = vld [vmem:[%s7 + $0x40] sm:$0xff]
      %v466 = vld [vmem:[%s7 + $0x48] sm:$0xff]
      %v467 = vld [vmem:[%s7 + $0x50] sm:$0xff]
      %v468 = vld [vmem:[%s7 + $0x58] sm:$0xff]
      %v469 = vld [vmem:[%s7 + $0x60] sm:$0xff]
      %v470 = vld [vmem:[%s7 + $0x68] sm:$0xff]
      %v471 = vld [vmem:[%s7 + $0x70] sm:$0xff]
      %v472 = vld [vmem:[%s7 + $0x78] sm:$0xff]
      %v473 = vld [vmem:[%s8] sm:$0x1]
      %v475 = vlaneseq
      %v476 = vshrl.u32 %v475, 7
      %v477 = vsub.s32 0, %v476
      %v478 = vrot.slane %v473, %v477
      %480 = vmatprep.subr.mxu0 0.0
      %481 = vmatpush1.msra.mxu0 %v457
      %482 = vmatprep.subr.mxu0 0.0
      %483 = vmatpush1.msra.mxu0 %v458
      %484 = vmatprep.subr.mxu0 0.0
      %485 = vmatpush1.msra.mxu0 %v459
      %486 = vmatprep.subr.mxu0 0.0
      %487 = vmatpush1.msra.mxu0 %v460
      %488 = vmatprep.subr.mxu0 0.0
      %489 = vmatpush1.msra.mxu0 %v461
      %490 = vmatprep.subr.mxu0 0.0
      %491 = vmatpush1.msra.mxu0 %v462
      %492 = vmatprep.subr.mxu0 0.0
      %493 = vmatpush1.msra.mxu0 %v463
      %494 = vmatprep.subr.mxu0 0.0
      %495 = vmatpush1.msra.mxu0 %v464
      %496 = vmatprep.subr.mxu0 0.0
      %497 = vmatpush1.msra.mxu0 %v465
      %498 = vmatprep.subr.mxu0 0.0
      %499 = vmatpush1.msra.mxu0 %v466
      %500 = vmatprep.subr.mxu0 0.0
      %501 = vmatpush1.msra.mxu0 %v467
      %502 = vmatprep.subr.mxu0 0.0
      %503 = vmatpush1.msra.mxu0 %v468
      %504 = vmatprep.subr.mxu0 0.0
      %505 = vmatpush1.msra.mxu0 %v469
      %506 = vmatprep.subr.mxu0 0.0
      %507 = vmatpush1.msra.mxu0 %v470
      %508 = vmatprep.subr.mxu0 0.0
      %509 = vmatpush1.msra.mxu0 %v471
      %510 = vmatprep.subr.mxu0 0.0
      %511 = vmatpush1.msra.mxu0 %v472
      %512 = vmatprep.subr.mxu0 0.0
      %513 = vmatpush1.msra.mxu0 0.0
      %514 = vmatprep.subr.mxu0 0.0
      %515 = vmatpush1.msra.mxu0 0.0
      %516 = vmatprep.subr.mxu0 0.0
      %517 = vmatpush1.msra.mxu0 0.0
      %518 = vmatprep.subr.mxu0 0.0
      %519 = vmatpush1.msra.mxu0 0.0
      %520 = vmatprep.subr.mxu0 0.0
      %521 = vmatpush1.msra.mxu0 0.0
      %522 = vmatprep.subr.mxu0 0.0
      %523 = vmatpush1.msra.mxu0 0.0
      %524 = vmatprep.subr.mxu0 0.0
      %525 = vmatpush1.msra.mxu0 0.0
      %526 = vmatprep.subr.mxu0 0.0
      %527 = vmatpush1.msra.mxu0 0.0
      %528 = vmatprep.subr.mxu0 0.0
      %529 = vmatpush1.msra.mxu0 0.0
      %530 = vmatprep.subr.mxu0 0.0
      %531 = vmatpush1.msra.mxu0 0.0
      %532 = vmatprep.subr.mxu0 0.0
      %533 = vmatpush1.msra.mxu0 0.0
      %534 = vmatprep.subr.mxu0 0.0
      %535 = vmatpush1.msra.mxu0 0.0
      %536 = vmatprep.subr.mxu0 0.0
      %537 = vmatpush1.msra.mxu0 0.0
      %538 = vmatprep.subr.mxu0 0.0
      %539 = vmatpush1.msra.mxu0 0.0
      %540 = vmatprep.subr.mxu0 0.0
      %541 = vmatpush1.msra.mxu0 0.0
      %542 = vmatprep.subr.mxu0 0.0
      %543 = vmatpush1.msra.mxu0 0.0
      %544 = vmatprep.mubr.f32.mxu0 0.0
      %545 = vmatmul.mubr.f32.gmra.mrb[0].mxu0 %v456
      %v546 = vpop.f32.mrb[0].mxu0
      %v547 = vadd.f32 %v478, %v546
      %v548 = vpop.f32.mrb[0].mxu0
      %549 = vdwg.mxu0
      %v550 = vmax.f32 %v547, 0.0
      %v551 = vld [vmem:[%s9] sm:$0xff]
      %v552 = vld [vmem:[%s9 + $0x8] sm:$0xff]
      %v553 = vld [vmem:[%s9 + $0x10] sm:$0xff]
      %v554 = vld [vmem:[%s9 + $0x18] sm:$0xff]
      %v555 = vld [vmem:[%s9 + $0x20] sm:$0xff]
      %v556 = vld [vmem:[%s9 + $0x28] sm:$0xff]
      %v557 = vld [vmem:[%s9 + $0x30] sm:$0xff]
      %v558 = vld [vmem:[%s9 + $0x38] sm:$0xff]
      %v559 = vld [vmem:[%s9 + $0x40] sm:$0xff]
      %v560 = vld [vmem:[%s9 + $0x48] sm:$0xff]
      %v561 = vld [vmem:[%s9 + $0x50] sm:$0xff]
      %v562 = vld [vmem:[%s9 + $0x58] sm:$0xff]
      %v563 = vld [vmem:[%s9 + $0x60] sm:$0xff]
      %v564 = vld [vmem:[%s9 + $0x68] sm:$0xff]
      %v565 = vld [vmem:[%s9 + $0x70] sm:$0xff]
      %v566 = vld [vmem:[%s9 + $0x78] sm:$0xff]
      %v567 = vld [vmem:[%s10] sm:$0x1]
      %v569 = vlaneseq
      %v570 = vshrl.u32 %v569, 7
      %v571 = vsub.s32 0, %v570
      %v572 = vrot.slane %v567, %v571
      %574 = vmatprep.subr.mxu0 0.0
      %575 = vmatpush1.msra.mxu0 %v551
      %576 = vmatprep.subr.mxu0 0.0
      %577 = vmatpush1.msra.mxu0 %v552
      %578 = vmatprep.subr.mxu0 0.0
      %579 = vmatpush1.msra.mxu0 %v553
      %580 = vmatprep.subr.mxu0 0.0
      %581 = vmatpush1.msra.mxu0 %v554
      %582 = vmatprep.subr.mxu0 0.0
      %583 = vmatpush1.msra.mxu0 %v555
      %584 = vmatprep.subr.mxu0 0.0
      %585 = vmatpush1.msra.mxu0 %v556
      %586 = vmatprep.subr.mxu0 0.0
      %587 = vmatpush1.msra.mxu0 %v557
      %588 = vmatprep.subr.mxu0 0.0
      %589 = vmatpush1.msra.mxu0 %v558
      %590 = vmatprep.subr.mxu0 0.0
      %591 = vmatpush1.msra.mxu0 %v559
      %592 = vmatprep.subr.mxu0 0.0
      %593 = vmatpush1.msra.mxu0 %v560
      %594 = vmatprep.subr.mxu0 0.0
      %595 = vmatpush1.msra.mxu0 %v561
      %596 = vmatprep.subr.mxu0 0.0
      %597 = vmatpush1.msra.mxu0 %v562
      %598 = vmatprep.subr.mxu0 0.0
      %599 = vmatpush1.msra.mxu0 %v563
      %600 = vmatprep.subr.mxu0 0.0
      %601 = vmatpush1.msra.mxu0 %v564
      %602 = vmatprep.subr.mxu0 0.0
      %603 = vmatpush1.msra.mxu0 %v565
      %604 = vmatprep.subr.mxu0 0.0
      %605 = vmatpush1.msra.mxu0 %v566
      %606 = vmatprep.subr.mxu0 0.0
      %607 = vmatpush1.msra.mxu0 0.0
      %608 = vmatprep.subr.mxu0 0.0
      %609 = vmatpush1.msra.mxu0 0.0
      %610 = vmatprep.subr.mxu0 0.0
      %611 = vmatpush1.msra.mxu0 0.0
      %612 = vmatprep.subr.mxu0 0.0
      %613 = vmatpush1.msra.mxu0 0.0
      %614 = vmatprep.subr.mxu0 0.0
      %615 = vmatpush1.msra.mxu0 0.0
      %616 = vmatprep.subr.mxu0 0.0
      %617 = vmatpush1.msra.mxu0 0.0
      %618 = vmatprep.subr.mxu0 0.0
      %619 = vmatpush1.msra.mxu0 0.0
      %620 = vmatprep.subr.mxu0 0.0
      %621 = vmatpush1.msra.mxu0 0.0
      %622 = vmatprep.subr.mxu0 0.0
      %623 = vmatpush1.msra.mxu0 0.0
      %624 = vmatprep.subr.mxu0 0.0
      %625 = vmatpush1.msra.mxu0 0.0
      %626 = vmatprep.subr.mxu0 0.0
      %627 = vmatpush1.msra.mxu0 0.0
      %628 = vmatprep.subr.mxu0 0.0
      %629 = vmatpush1.msra.mxu0 0.0
      %630 = vmatprep.subr.mxu0 0.0
      %631 = vmatpush1.msra.mxu0 0.0
      %632 = vmatprep.subr.mxu0 0.0
      %633 = vmatpush1.msra.mxu0 0.0
      %634 = vmatprep.subr.mxu0 0.0
      %635 = vmatpush1.msra.mxu0 0.0
      %636 = vmatprep.subr.mxu0 0.0
      %637 = vmatpush1.msra.mxu0 0.0
      %638 = vmatprep.mubr.f32.mxu0 0.0
      %639 = vmatmul.mubr.f32.gmra.mrb[0].mxu0 %v550
      %v640 = vpop.f32.mrb[0].mxu0
      %v641 = vadd.f32 %v572, %v640
      %v642 = vpop.f32.mrb[0].mxu0
      %643 = vdwg.mxu0
      %v644 = vxor.u32 %v641, 2147483648
      %v645 = vmul.f32 %v644, 1.442695
      %v646 = vpow.pop %v645
      %v647 = vadd.f32 %v646, 1.0
      %v648 = vrcp.pop %v647
      %v649 = vmul.f32 1.0, %v648
      %650 = vst [vmem:[%s12] sm:$0xff] %v649
    $region53: #{context_forward.4} parent=1 // pred_fallthru
      _
    // Predicated region
    $region54: #{context_forward.4} parent=1 // pred_check
      _
    $region55: #{context_forward.4} parent=1 // pred_check_branch
      %652 = sbr.rel (0) target = $region57
    $region56: #{context_forward.4} parent=1 // pred_region
      %s654 = ssub.s32 768, 768
      %655 = vsyncadd [#allocation3], %s654
      %s656 = sshll.u32 [#allocation2], 4
      %s657 = int_to_ptr.vmem [resolvable:$true] %s656
      %662 = dma.vmem_to_hbm [thread:$0]  %s657, 768, %s11, [#allocation3], 128, 128, 8
    $region57: #{context_forward.4} parent=1 // pred_fallthru
      _
    // Predicated region
    $region58: #{context_forward.4} parent=1 // pred_check
      _
    $region59: #{context_forward.4} parent=1 // pred_check_branch
      %664 = sbr.rel (0) target = $region61
    $region60: #{context_forward.4} parent=1 // pred_region
      _
    $region61: #{context_forward.4} parent=1 // pred_fallthru
      _
    // Predicated region
    $region62: #{context_forward.4} parent=1 // pred_check
      _
    $region63: #{context_forward.4} parent=1 // pred_check_branch
      %666 = sbr.rel (0) target = $region65
    $region64: #{context_forward.4} parent=1 // pred_region
      %667 = dma.done [#allocation3], 768
    $region65: #{context_forward.4} parent=1 // pred_fallthru
      _
    // Predicated region
    $region66: #{context_forward.4} parent=1 // pred_check
      _
    $region67: #{context_forward.4} parent=1 // pred_check_branch
      %669 = sbr.rel (0) target = $region69
    $region68: #{context_forward.4} parent=1 // pred_region
      _
    $region69: #{context_forward.4} parent=1 // pred_fallthru
      _
    %670 = vsyncpa [#allocation3], 1

</llo_original>
